<compile_context>
chip_gen: v6e
topology: v6e:2x2x1
jax: 0.10.0
libtpu: 0.0.40
codegen_flags: <defaults>
</compile_context>

<pallas_src>
import jax
import jax.numpy as jnp
from jax.experimental import pallas as pl
from jax.experimental.pallas import tpu as pltpu

HIDDEN = 150        # nn.Linear(input_dim, 150) -> 150 -> 150 -> 1
HIDDEN_PAD = 160    # padded to a multiple of 16 (bf16 sublane packing)
LANE = 128


def _round_up(x, m):
    return ((x + m - 1) // m) * m


def _sigmoid(x):
    # Single EUP op (tanh); exact up to f32 rounding.
    return 0.5 * jnp.tanh(0.5 * x) + 0.5


def disc_kernel(x_ref,
                w1_ref, b1_ref,
                w2_ref, b2_ref,
                w3_ref, b3_ref,
                w4_ref, b4_ref,
                o_ref):
    # Natural (bm, D_pad) block; transpose + bf16 cast in-kernel so the batch
    # lives on the lane axis for every intermediate and for the output tile.
    xT = jnp.transpose(x_ref[...]).astype(jnp.bfloat16)                       # (D_pad, bm)
    h = _sigmoid(jnp.dot(w1_ref[...], xT,
                         preferred_element_type=jnp.float32) + b1_ref[...])   # (160, bm) f32
    h = _sigmoid(jnp.dot(w2_ref[...], h.astype(jnp.bfloat16),
                         preferred_element_type=jnp.float32) + b2_ref[...])
    h = _sigmoid(jnp.dot(w3_ref[...], h.astype(jnp.bfloat16),
                         preferred_element_type=jnp.float32) + b3_ref[...])
    # Final 150->1 layer: broadcast multiply + sublane reduce (keeps the MXU
    # out of a single-row/column matmul) -> lane-dense (1, bm) result.
    logits = jnp.sum(h * w4_ref[...], axis=0, keepdims=True) + b4_ref[...]    # (1, bm)
    o_ref[...] = _sigmoid(logits).astype(o_ref.dtype)


def init_params(key, input_dim, dtype=jnp.float32):
    """PyTorch-layout params: list of (weight (out, in), bias (out,))."""
    dims = [(input_dim, HIDDEN), (HIDDEN, HIDDEN), (HIDDEN, HIDDEN), (HIDDEN, 1)]
    params = []
    for fan_in, fan_out in dims:
        key, kw, kb = jax.random.split(key, 3)
        bound = 1.0 / (fan_in ** 0.5)
        w = jax.random.uniform(kw, (fan_out, fan_in), dtype, -bound, bound)
        b = jax.random.uniform(kb, (fan_out,), dtype, -bound, bound)
        params.append((w, b))
    return params


def aush_discriminator(x, params, *, bm=512):
    """x: (B, D) float32. params: PyTorch-layout [(w, b)] * 4. Returns (B, 1)."""
    (w1, b1), (w2, b2), (w3, b3), (w4, b4) = params
    x = x.astype(jnp.float32)
    B, D = x.shape

    # Batch tile: >=128 rows, but don't over-pad tiny batches.
    bm = max(LANE, min(bm, _round_up(B, LANE)))
    D_pad = _round_up(D, LANE)
    B_pad = _round_up(B, bm)
    # v7x: ensure >=2 grid steps when possible so ("parallel",) uses both TCs.
    if B_pad // bm < 2 and B_pad > LANE:
        bm = max(LANE, _round_up(B_pad // 2, LANE))
        B_pad = _round_up(B, bm)

    # ---- wrapper-side plumbing: zero-pad only (no transpose, no bf16 copy) ----
    if (B_pad, D_pad) != (B, D):
        x_in = jnp.zeros((B_pad, D_pad), jnp.float32).at[:B, :D].set(x)
    else:
        x_in = x

    def pad_w(w, out_p, in_p):          # PyTorch (out, in) layout, zero-padded, bf16
        return jnp.zeros((out_p, in_p), jnp.bfloat16).at[
            :w.shape[0], :w.shape[1]].set(w.astype(jnp.bfloat16))

    def pad_b(b, out_p):                # column bias, f32 (broadcasts over lanes)
        return jnp.zeros((out_p, 1), jnp.float32).at[:b.shape[0], 0].set(
            b.astype(jnp.float32))

    w1p = pad_w(w1, HIDDEN_PAD, D_pad)
    w2p = pad_w(w2, HIDDEN_PAD, HIDDEN_PAD)
    w3p = pad_w(w3, HIDDEN_PAD, HIDDEN_PAD)
    # Last layer stays f32: it is a VPU multiply + reduce, not an MXU op.
    w4p = jnp.zeros((HIDDEN_PAD, 1), jnp.float32).at[:HIDDEN, 0].set(
        w4.reshape(-1).astype(jnp.float32))
    b1p, b2p, b3p = pad_b(b1, HIDDEN_PAD), pad_b(b2, HIDDEN_PAD), pad_b(b3, HIDDEN_PAD)
    b4p = b4.reshape(1, 1).astype(jnp.float32)

    grid = (B_pad // bm,)

    def full_spec(arr):   # small parameter tensors: one full block, resident every step
        return pl.BlockSpec(arr.shape, lambda i: (0, 0))

    param_bytes = sum(int(p.size) * p.dtype.itemsize
                      for p in (w1p, b1p, w2p, b2p, w3p, b3p, w4p, b4p))
    cost = pl.CostEstimate(
        flops=2 * B_pad * (D_pad * HIDDEN_PAD + 2 * HIDDEN_PAD * HIDDEN_PAD + HIDDEN_PAD),
        transcendentals=B_pad * (3 * HIDDEN_PAD + 1),
        bytes_accessed=int(x_in.size) * 4 + param_bytes + B_pad * 4,
    )

    out = pl.pallas_call(
        disc_kernel,
        out_shape=jax.ShapeDtypeStruct((1, B_pad), jnp.float32),
        grid_spec=pltpu.PrefetchScalarGridSpec(
            num_scalar_prefetch=0,
            grid=grid,
            in_specs=[
                pl.BlockSpec((bm, D_pad), lambda i: (i, 0)),   # natural-layout batch tiles
                full_spec(w1p), full_spec(b1p),
                full_spec(w2p), full_spec(b2p),
                full_spec(w3p), full_spec(b3p),
                full_spec(w4p), full_spec(b4p),
            ],
            out_specs=pl.BlockSpec((1, bm), lambda i: (0, i)),  # lane-dense output blocks
        ),
        compiler_params=pltpu.CompilerParams(
            dimension_semantics=("parallel",)),                 # v7x: shards grid steps across TCs
        cost_estimate=cost,
    )(x_in, w1p, b1p, w2p, b2p, w3p, b3p, w4p, b4p)

    return out[0, :B].reshape(B, 1)


def reference_forward(x, params):
    h = x
    for w, b in params:
        h = jax.nn.sigmoid(h @ w.T + b)
    return h


if __name__ == "__main__":
    key = jax.random.PRNGKey(0)
    k_x, k_p = jax.random.split(key)

    batch, input_dim = 16, 32
    x = jax.random.normal(k_x, (batch, input_dim), jnp.float32)
    params = init_params(k_p, input_dim)

    out = aush_discriminator(x, params, bm=512)
    out = jax.block_until_ready(out)

    ref = reference_forward(x, params)
    assert out.shape == (batch, 1)
    # bf16 matmul inputs / inter-layer bf16 casts -> slightly loosened tolerance
    assert jnp.allclose(out, ref, atol=1e-2, rtol=0.0), "mismatch vs JAX reference"

    print("KERNEL_OK")
</pallas_src>

<mosaic_0001>
module attributes {stable_mosaic.version = 11 : i64} {
  func.func @disc_kernel(%arg0: i32, %arg1: memref<128x128xf32, #tpu.memory_space<vmem>>, %arg2: memref<160x128xbf16, #tpu.memory_space<vmem>>, %arg3: memref<160x1xf32, #tpu.memory_space<vmem>>, %arg4: memref<160x160xbf16, #tpu.memory_space<vmem>>, %arg5: memref<160x1xf32, #tpu.memory_space<vmem>>, %arg6: memref<160x160xbf16, #tpu.memory_space<vmem>>, %arg7: memref<160x1xf32, #tpu.memory_space<vmem>>, %arg8: memref<160x1xf32, #tpu.memory_space<vmem>>, %arg9: memref<1x1xf32, #tpu.memory_space<vmem>>, %arg10: memref<1x128xf32, #tpu.memory_space<vmem>>) attributes {dimension_semantics = [#tpu.dimension_semantics<parallel>], iteration_bounds = array<i64: 1>, scalar_prefetch = 0 : i64, scratch_operands = 0 : i64, tpu.core_type = #tpu.core_type<tc>, window_params = [{transform_indices = @transform_0, window_bounds = array<i64: 128, 128>}, {pipeline_mode = #tpu.pipeline_mode<synchronous>, transform_indices = @transform_1, window_bounds = array<i64: 160, 128>}, {pipeline_mode = #tpu.pipeline_mode<synchronous>, transform_indices = @transform_2, window_bounds = array<i64: 160, 1>}, {pipeline_mode = #tpu.pipeline_mode<synchronous>, transform_indices = @transform_3, window_bounds = array<i64: 160, 160>}, {pipeline_mode = #tpu.pipeline_mode<synchronous>, transform_indices = @transform_4, window_bounds = array<i64: 160, 1>}, {pipeline_mode = #tpu.pipeline_mode<synchronous>, transform_indices = @transform_5, window_bounds = array<i64: 160, 160>}, {pipeline_mode = #tpu.pipeline_mode<synchronous>, transform_indices = @transform_6, window_bounds = array<i64: 160, 1>}, {pipeline_mode = #tpu.pipeline_mode<synchronous>, transform_indices = @transform_7, window_bounds = array<i64: 160, 1>}, {pipeline_mode = #tpu.pipeline_mode<synchronous>, transform_indices = @transform_8, window_bounds = array<i64: 1, 1>}, {transform_indices = @transform_9, window_bounds = array<i64: 1, 128>}]} {
    %c0 = arith.constant 0 : index
    %c0_0 = arith.constant 0 : index
    %0 = vector.load %arg1[%c0, %c0_0] : memref<128x128xf32, #tpu.memory_space<vmem>>, vector<128x128xf32>
    %1 = tpu.transpose %0, [1, 0] : vector<128x128xf32> -> vector<128x128xf32>
    %2 = arith.truncf %1 : vector<128x128xf32> to vector<128x128xbf16>
    %c0_1 = arith.constant 0 : index
    %c0_2 = arith.constant 0 : index
    %3 = vector.load %arg2[%c0_1, %c0_2] : memref<160x128xbf16, #tpu.memory_space<vmem>>, vector<160x128xbf16>
    %cst = arith.constant dense<0.000000e+00> : vector<160x128xf32>
    %4 = tpu.matmul %3, %2, %cst {dimension_numbers = #tpu.dot_dimension_numbers<[1], [0], [0], [1], [0, 0, 1, 1], [], []>} : vector<160x128xbf16>, vector<128x128xbf16>, vector<160x128xf32> -> vector<160x128xf32>
    %c0_3 = arith.constant 0 : index
    %c0_4 = arith.constant 0 : index
    %5 = vector.load %arg3[%c0_3, %c0_4] : memref<160x1xf32, #tpu.memory_space<vmem>>, vector<160x1xf32>
    %6 = vector.broadcast %5 : vector<160x1xf32> to vector<160x128xf32>
    %7 = arith.addf %4, %6 : vector<160x128xf32>
    %cst_5 = arith.constant 5.000000e-01 : f32
    %8 = vector.broadcast %cst_5 : f32 to vector<160x128xf32>
    %9 = arith.mulf %8, %7 : vector<160x128xf32>
    %10 = math.tanh %9 : vector<160x128xf32>
    %cst_6 = arith.constant 5.000000e-01 : f32
    %11 = vector.broadcast %cst_6 : f32 to vector<160x128xf32>
    %12 = arith.mulf %11, %10 : vector<160x128xf32>
    %cst_7 = arith.constant 5.000000e-01 : f32
    %13 = vector.broadcast %cst_7 : f32 to vector<160x128xf32>
    %14 = arith.addf %12, %13 : vector<160x128xf32>
    %c0_8 = arith.constant 0 : index
    %c0_9 = arith.constant 0 : index
    %15 = vector.load %arg4[%c0_8, %c0_9] : memref<160x160xbf16, #tpu.memory_space<vmem>>, vector<160x160xbf16>
    %16 = arith.truncf %14 : vector<160x128xf32> to vector<160x128xbf16>
    %cst_10 = arith.constant dense<0.000000e+00> : vector<160x128xf32>
    %17 = tpu.matmul %15, %16, %cst_10 {dimension_numbers = #tpu.dot_dimension_numbers<[1], [0], [0], [1], [0, 0, 1, 1], [], []>} : vector<160x160xbf16>, vector<160x128xbf16>, vector<160x128xf32> -> vector<160x128xf32>
    %c0_11 = arith.constant 0 : index
    %c0_12 = arith.constant 0 : index
    %18 = vector.load %arg5[%c0_11, %c0_12] : memref<160x1xf32, #tpu.memory_space<vmem>>, vector<160x1xf32>
    %19 = vector.broadcast %18 : vector<160x1xf32> to vector<160x128xf32>
    %20 = arith.addf %17, %19 : vector<160x128xf32>
    %cst_13 = arith.constant 5.000000e-01 : f32
    %21 = vector.broadcast %cst_13 : f32 to vector<160x128xf32>
    %22 = arith.mulf %21, %20 : vector<160x128xf32>
    %23 = math.tanh %22 : vector<160x128xf32>
    %cst_14 = arith.constant 5.000000e-01 : f32
    %24 = vector.broadcast %cst_14 : f32 to vector<160x128xf32>
    %25 = arith.mulf %24, %23 : vector<160x128xf32>
    %cst_15 = arith.constant 5.000000e-01 : f32
    %26 = vector.broadcast %cst_15 : f32 to vector<160x128xf32>
    %27 = arith.addf %25, %26 : vector<160x128xf32>
    %c0_16 = arith.constant 0 : index
    %c0_17 = arith.constant 0 : index
    %28 = vector.load %arg6[%c0_16, %c0_17] : memref<160x160xbf16, #tpu.memory_space<vmem>>, vector<160x160xbf16>
    %29 = arith.truncf %27 : vector<160x128xf32> to vector<160x128xbf16>
    %cst_18 = arith.constant dense<0.000000e+00> : vector<160x128xf32>
    %30 = tpu.matmul %28, %29, %cst_18 {dimension_numbers = #tpu.dot_dimension_numbers<[1], [0], [0], [1], [0, 0, 1, 1], [], []>} : vector<160x160xbf16>, vector<160x128xbf16>, vector<160x128xf32> -> vector<160x128xf32>
    %c0_19 = arith.constant 0 : index
    %c0_20 = arith.constant 0 : index
    %31 = vector.load %arg7[%c0_19, %c0_20] : memref<160x1xf32, #tpu.memory_space<vmem>>, vector<160x1xf32>
    %32 = vector.broadcast %31 : vector<160x1xf32> to vector<160x128xf32>
    %33 = arith.addf %30, %32 : vector<160x128xf32>
    %cst_21 = arith.constant 5.000000e-01 : f32
    %34 = vector.broadcast %cst_21 : f32 to vector<160x128xf32>
    %35 = arith.mulf %34, %33 : vector<160x128xf32>
    %36 = math.tanh %35 : vector<160x128xf32>
    %cst_22 = arith.constant 5.000000e-01 : f32
    %37 = vector.broadcast %cst_22 : f32 to vector<160x128xf32>
    %38 = arith.mulf %37, %36 : vector<160x128xf32>
    %cst_23 = arith.constant 5.000000e-01 : f32
    %39 = vector.broadcast %cst_23 : f32 to vector<160x128xf32>
    %40 = arith.addf %38, %39 : vector<160x128xf32>
    %c0_24 = arith.constant 0 : index
    %c0_25 = arith.constant 0 : index
    %41 = vector.load %arg8[%c0_24, %c0_25] : memref<160x1xf32, #tpu.memory_space<vmem>>, vector<160x1xf32>
    %42 = vector.broadcast %41 : vector<160x1xf32> to vector<160x128xf32>
    %43 = arith.mulf %40, %42 : vector<160x128xf32>
    %cst_26 = arith.constant dense<0.000000e+00> : vector<128xf32>
    %44 = vector.multi_reduction <add>, %43, %cst_26 [0] : vector<160x128xf32> to vector<128xf32>
    %45 = vector.shape_cast %44 : vector<128xf32> to vector<1x128xf32>
    %c0_27 = arith.constant 0 : index
    %c0_28 = arith.constant 0 : index
    %46 = vector.load %arg9[%c0_27, %c0_28] : memref<1x1xf32, #tpu.memory_space<vmem>>, vector<1x1xf32>
    %47 = vector.broadcast %46 : vector<1x1xf32> to vector<1x128xf32>
    %48 = arith.addf %45, %47 : vector<1x128xf32>
    %cst_29 = arith.constant 5.000000e-01 : f32
    %49 = vector.broadcast %cst_29 : f32 to vector<1x128xf32>
    %50 = arith.mulf %49, %48 : vector<1x128xf32>
    %51 = math.tanh %50 : vector<1x128xf32>
    %cst_30 = arith.constant 5.000000e-01 : f32
    %52 = vector.broadcast %cst_30 : f32 to vector<1x128xf32>
    %53 = arith.mulf %52, %51 : vector<1x128xf32>
    %cst_31 = arith.constant 5.000000e-01 : f32
    %54 = vector.broadcast %cst_31 : f32 to vector<1x128xf32>
    %55 = arith.addf %53, %54 : vector<1x128xf32>
    %c0_32 = arith.constant 0 : index
    %c0_33 = arith.constant 0 : index
    %56 = vector.load %arg10[%c0_32, %c0_33] : memref<1x128xf32, #tpu.memory_space<vmem>>, vector<1x128xf32>
    tpu.vector_store %arg10[%c0_32, %c0_33], %55 {strides = array<i32>} : memref<1x128xf32, #tpu.memory_space<vmem>>, vector<1x128xf32>,
    return
  }
  func.func @transform_0(%arg0: i32) -> (i32, i32) {
    %c0_i32 = arith.constant 0 : i32
    %c0_i32_0 = arith.constant 0 : i32
    return %arg0, %c0_i32 : i32, i32
  }
  func.func @transform_1(%arg0: i32) -> (i32, i32) {
    %c0_i32 = arith.constant 0 : i32
    %c0_i32_0 = arith.constant 0 : i32
    %c0_i32_1 = arith.constant 0 : i32
    return %c0_i32, %c0_i32_0 : i32, i32
  }
  func.func @transform_2(%arg0: i32) -> (i32, i32) {
    %c0_i32 = arith.constant 0 : i32
    %c0_i32_0 = arith.constant 0 : i32
    %c0_i32_1 = arith.constant 0 : i32
    return %c0_i32, %c0_i32_0 : i32, i32
  }
  func.func @transform_3(%arg0: i32) -> (i32, i32) {
    %c0_i32 = arith.constant 0 : i32
    %c0_i32_0 = arith.constant 0 : i32
    %c0_i32_1 = arith.constant 0 : i32
    return %c0_i32, %c0_i32_0 : i32, i32
  }
  func.func @transform_4(%arg0: i32) -> (i32, i32) {
    %c0_i32 = arith.constant 0 : i32
    %c0_i32_0 = arith.constant 0 : i32
    %c0_i32_1 = arith.constant 0 : i32
    return %c0_i32, %c0_i32_0 : i32, i32
  }
  func.func @transform_5(%arg0: i32) -> (i32, i32) {
    %c0_i32 = arith.constant 0 : i32
    %c0_i32_0 = arith.constant 0 : i32
    %c0_i32_1 = arith.constant 0 : i32
    return %c0_i32, %c0_i32_0 : i32, i32
  }
  func.func @transform_6(%arg0: i32) -> (i32, i32) {
    %c0_i32 = arith.constant 0 : i32
    %c0_i32_0 = arith.constant 0 : i32
    %c0_i32_1 = arith.constant 0 : i32
    return %c0_i32, %c0_i32_0 : i32, i32
  }
  func.func @transform_7(%arg0: i32) -> (i32, i32) {
    %c0_i32 = arith.constant 0 : i32
    %c0_i32_0 = arith.constant 0 : i32
    %c0_i32_1 = arith.constant 0 : i32
    return %c0_i32, %c0_i32_0 : i32, i32
  }
  func.func @transform_8(%arg0: i32) -> (i32, i32) {
    %c0_i32 = arith.constant 0 : i32
    %c0_i32_0 = arith.constant 0 : i32
    %c0_i32_1 = arith.constant 0 : i32
    return %c0_i32, %c0_i32_0 : i32, i32
  }
  func.func @transform_9(%arg0: i32) -> (i32, i32) {
    %c0_i32 = arith.constant 0 : i32
    %c0_i32_0 = arith.constant 0 : i32
    return %c0_i32, %arg0 : i32, i32
  }
}

</mosaic_0001>

<llo_original>
// kernel: tpu_custom_call.1
$region0: #{tpu_custom_call.1}
  #allocation0 [shape = 'u32[]', space=smem, size = 0x4, offset = 0x4, fixed_abs, tag = 'smem constant byte address 0x4 - core index']
  #allocation1 [shape = 'u32[144,128]{1,0:T(1,128)}', space=vmem, size = 0x12000, scoped, tag = 'internal scratch']
  #allocation2 [shape = 'f32[1,1]{1,0:T(1,128)S(1)}', space=vmem, size = 0x200, scoped, tag = 'scoped memory for tpu_custom_call.1']
  %s0 = inlined_call_operand.vmem [shape: f32[128,128], index: 0, kind: input, shape index: {}]
  %s1 = inlined_call_operand.vmem [shape: bf16[160,128], index: 1, kind: input, shape index: {}]
  %s2 = inlined_call_operand.vmem [shape: f32[160,1], index: 2, kind: input, shape index: {}]
  %s3 = inlined_call_operand.vmem [shape: bf16[160,160], index: 3, kind: input, shape index: {}]
  %s4 = inlined_call_operand.vmem [shape: f32[160,1], index: 4, kind: input, shape index: {}]
  %s5 = inlined_call_operand.vmem [shape: bf16[160,160], index: 5, kind: input, shape index: {}]
  %s6 = inlined_call_operand.vmem [shape: f32[160,1], index: 6, kind: input, shape index: {}]
  %s7 = inlined_call_operand.vmem [shape: f32[160,1], index: 7, kind: input, shape index: {}]
  %s8 = inlined_call_operand.<no memory space> [shape: f32[1,1], index: 8, kind: input, shape index: {}]
  %s9 = inlined_call_operand.hbm [shape: f32[1,128], index: 9, kind: output, shape index: {}]
  %s10 = sld [smem:[#allocation0]]
  $region46: #{tpu_custom_call.1} parent=0
    _
  %s12 = ssub.s32 1, %s10
  %s13 = scalar_select 0, %s12, %s10
  %v14 = vstv %s8
  %15 = vst [vmem:[#allocation2] sm:$0x1] %v14
  $region1: #{tpu_custom_call.1} parent=0
    #allocation3 [shape = 'u8[512]{0}', space=vmem, size = 0x400, scoped, tag = 'output window, operand 0, single buffered']
    #allocation4 [shape = 's32[1]{0}', space=sflag, size = 0x4, scoped, tag = 'scoped memory for tpu_custom_call.1']
    %16 = vsyncpa [#allocation4], 0
    // Predicated region
    $region2: #{tpu_custom_call.1} parent=1 // pred_check
      _
    $region3: #{tpu_custom_call.1} parent=1 // pred_check_branch
      %18 = sbr.rel (0) target = $region5
    $region4: #{tpu_custom_call.1} parent=1 // pred_region
      _
    $region5: #{tpu_custom_call.1} parent=1 // pred_fallthru
      _
    // Predicated region
    $region6: #{tpu_custom_call.1} parent=1 // pred_check
      _
    $region7: #{tpu_custom_call.1} parent=1 // pred_check_branch
      %20 = sbr.rel (0) target = $region9
    $region8: #{tpu_custom_call.1} parent=1 // pred_region
      _
    $region9: #{tpu_custom_call.1} parent=1 // pred_fallthru
      _
    // Predicated region
    $region10: #{tpu_custom_call.1} parent=1 // pred_check
      _
    $region11: #{tpu_custom_call.1} parent=1 // pred_check_branch
      %22 = sbr.rel (0) target = $region13
    $region12: #{tpu_custom_call.1} parent=1 // pred_region
      _
    $region13: #{tpu_custom_call.1} parent=1 // pred_fallthru
      _
    // Predicated region
    $region14: #{tpu_custom_call.1} parent=1 // pred_check
      _
    $region15: #{tpu_custom_call.1} parent=1 // pred_check_branch
      %24 = sbr.rel (0) target = $region17
    $region16: #{tpu_custom_call.1} parent=1 // pred_region
      _
    $region17: #{tpu_custom_call.1} parent=1 // pred_fallthru
      _
    // Predicated region
    $region18: #{tpu_custom_call.1} parent=1 // pred_check
      _
    $region19: #{tpu_custom_call.1} parent=1 // pred_check_branch
      %26 = sbr.rel (0) target = $region21
    $region20: #{tpu_custom_call.1} parent=1 // pred_region
      _
    $region21: #{tpu_custom_call.1} parent=1 // pred_fallthru
      _
    // Predicated region
    $region22: #{tpu_custom_call.1} parent=1 // pred_check
      _
    $region23: #{tpu_custom_call.1} parent=1 // pred_check_branch
      %28 = sbr.rel (0) target = $region25
    $region24: #{tpu_custom_call.1} parent=1 // pred_region
      _
    $region25: #{tpu_custom_call.1} parent=1 // pred_fallthru
      _
    // Predicated region
    $region26: #{tpu_custom_call.1} parent=1 // pred_check
      _
    $region27: #{tpu_custom_call.1} parent=1 // pred_check_branch
      %30 = sbr.rel (0) target = $region29
    $region28: #{tpu_custom_call.1} parent=1 // pred_region
      _
    $region29: #{tpu_custom_call.1} parent=1 // pred_fallthru
      _
    // Predicated region
    $region30: #{tpu_custom_call.1} parent=1 // pred_check
      _
    $region31: #{tpu_custom_call.1} parent=1 // pred_check_branch
      %32 = sbr.rel (0) target = $region33
    $region32: #{tpu_custom_call.1} parent=1 // pred_region
      _
    $region33: #{tpu_custom_call.1} parent=1 // pred_fallthru
      _
    // Predicated region
    $region34: #{tpu_custom_call.1} parent=1 // pred_check
      _
    $region35: #{tpu_custom_call.1} parent=1 // pred_check_branch
      %34 = sbr.rel (0) target = $region37
    $region36: #{tpu_custom_call.1} parent=1 // pred_region
      _
    $region37: #{tpu_custom_call.1} parent=1 // pred_fallthru
      _
    %v36 = vld [vmem:[%s0] sm:$0xff]
    %v37 = vld [vmem:[%s0 + $0x8] sm:$0xff]
    %v38 = vld [vmem:[%s0 + $0x10] sm:$0xff]
    %v39 = vld [vmem:[%s0 + $0x18] sm:$0xff]
    %v40 = vld [vmem:[%s0 + $0x20] sm:$0xff]
    %v41 = vld [vmem:[%s0 + $0x28] sm:$0xff]
    %v42 = vld [vmem:[%s0 + $0x30] sm:$0xff]
    %v43 = vld [vmem:[%s0 + $0x38] sm:$0xff]
    %v44 = vld [vmem:[%s0 + $0x40] sm:$0xff]
    %v45 = vld [vmem:[%s0 + $0x48] sm:$0xff]
    %v46 = vld [vmem:[%s0 + $0x50] sm:$0xff]
    %v47 = vld [vmem:[%s0 + $0x58] sm:$0xff]
    %v48 = vld [vmem:[%s0 + $0x60] sm:$0xff]
    %v49 = vld [vmem:[%s0 + $0x68] sm:$0xff]
    %v50 = vld [vmem:[%s0 + $0x70] sm:$0xff]
    %v51 = vld [vmem:[%s0 + $0x78] sm:$0xff]
    %52 = vxpose.xlu0.b32.start [1/16] %v36, 128
    %53 = vxpose.xlu0.b32.cont [2/16] %v37, 128
    %54 = vxpose.xlu0.b32.cont [3/16] %v38, 128
    %55 = vxpose.xlu0.b32.cont [4/16] %v39, 128
    %56 = vxpose.xlu0.b32.cont [5/16] %v40, 128
    %57 = vxpose.xlu0.b32.cont [6/16] %v41, 128
    %58 = vxpose.xlu0.b32.cont [7/16] %v42, 128
    %59 = vxpose.xlu0.b32.cont [8/16] %v43, 128
    %60 = vxpose.xlu0.b32.cont [9/16] %v44, 128
    %61 = vxpose.xlu0.b32.cont [10/16] %v45, 128
    %62 = vxpose.xlu0.b32.cont [11/16] %v46, 128
    %63 = vxpose.xlu0.b32.cont [12/16] %v47, 128
    %64 = vxpose.xlu0.b32.cont [13/16] %v48, 128
    %65 = vxpose.xlu0.b32.cont [14/16] %v49, 128
    %66 = vxpose.xlu0.b32.cont [15/16] %v50, 128
    %67 = vxpose.xlu0.b32.end [16/16] %v51, 128
    %v68 = vpop.trf.xlu0
    %v69 = vpop.trf.xlu0
    %v70 = vpop.trf.xlu0
    %v71 = vpop.trf.xlu0
    %v72 = vpop.trf.xlu0
    %v73 = vpop.trf.xlu0
    %v74 = vpop.trf.xlu0
    %v75 = vpop.trf.xlu0
    %v76 = vpop.trf.xlu0
    %v77 = vpop.trf.xlu0
    %v78 = vpop.trf.xlu0
    %v79 = vpop.trf.xlu0
    %v80 = vpop.trf.xlu0
    %v81 = vpop.trf.xlu0
    %v82 = vpop.trf.xlu0
    %v83 = vpop.trf.xlu0
    %v84 = vpack.c.bf16 %v69, %v68
    %v85 = vpack.c.bf16 %v71, %v70
    %v86 = vpack.c.bf16 %v73, %v72
    %v87 = vpack.c.bf16 %v75, %v74
    %v88 = vpack.c.bf16 %v77, %v76
    %v89 = vpack.c.bf16 %v79, %v78
    %v90 = vpack.c.bf16 %v81, %v80
    %v91 = vpack.c.bf16 %v83, %v82
    %v92 = vld [vmem:[%s1] sm:$0xf]
    %v93 = vld [vmem:[%s1 + $0x4] sm:$0xf]
    %v94 = vld [vmem:[%s1 + $0x8] sm:$0xf]
    %v95 = vld [vmem:[%s1 + $0xc] sm:$0xf]
    %v96 = vld [vmem:[%s1 + $0x10] sm:$0xf]
    %v97 = vld [vmem:[%s1 + $0x14] sm:$0xf]
    %v98 = vld [vmem:[%s1 + $0x18] sm:$0xf]
    %v99 = vld [vmem:[%s1 + $0x1c] sm:$0xf]
    %v100 = vld [vmem:[%s1 + $0x20] sm:$0xf]
    %v101 = vld [vmem:[%s1 + $0x24] sm:$0xf]
    %v102 = vld [vmem:[%s1 + $0x28] sm:$0xf]
    %v103 = vld [vmem:[%s1 + $0x2c] sm:$0xf]
    %v104 = vld [vmem:[%s1 + $0x30] sm:$0xf]
    %v105 = vld [vmem:[%s1 + $0x34] sm:$0xf]
    %v106 = vld [vmem:[%s1 + $0x38] sm:$0xf]
    %v107 = vld [vmem:[%s1 + $0x3c] sm:$0xf]
    %v108 = vld [vmem:[%s1 + $0x40] sm:$0xf]
    %v109 = vld [vmem:[%s1 + $0x44] sm:$0xf]
    %v110 = vld [vmem:[%s1 + $0x48] sm:$0xf]
    %v111 = vld [vmem:[%s1 + $0x4c] sm:$0xf]
    %v112 = vld [vmem:[%s2] sm:$0xff]
    %v113 = vld [vmem:[%s2 + $0x8] sm:$0xff]
    %v114 = vld [vmem:[%s2 + $0x10] sm:$0xff]
    %v115 = vld [vmem:[%s2 + $0x18] sm:$0xff]
    %v116 = vld [vmem:[%s2 + $0x20] sm:$0xff]
    %v117 = vld [vmem:[%s2 + $0x28] sm:$0xff]
    %v118 = vld [vmem:[%s2 + $0x30] sm:$0xff]
    %v119 = vld [vmem:[%s2 + $0x38] sm:$0xff]
    %v120 = vld [vmem:[%s2 + $0x40] sm:$0xff]
    %v121 = vld [vmem:[%s2 + $0x48] sm:$0xff]
    %v122 = vld [vmem:[%s2 + $0x50] sm:$0xff]
    %v123 = vld [vmem:[%s2 + $0x58] sm:$0xff]
    %v124 = vld [vmem:[%s2 + $0x60] sm:$0xff]
    %v125 = vld [vmem:[%s2 + $0x68] sm:$0xff]
    %v126 = vld [vmem:[%s2 + $0x70] sm:$0xff]
    %v127 = vld [vmem:[%s2 + $0x78] sm:$0xff]
    %v128 = vld [vmem:[%s2 + $0x80] sm:$0xff]
    %v129 = vld [vmem:[%s2 + $0x88] sm:$0xff]
    %v130 = vld [vmem:[%s2 + $0x90] sm:$0xff]
    %v131 = vld [vmem:[%s2 + $0x98] sm:$0xff]
    %133 = vset.pattern.permute.xlu0 0
    %134 = vperm.xlu0 %133, %v112
    %v135 = vpop.permute.xlu0 %134
    %138 = vset.pattern.permute.xlu0 0
    %139 = vperm.xlu0 %138, %v113
    %v140 = vpop.permute.xlu0 %139
    %143 = vset.pattern.permute.xlu0 0
    %144 = vperm.xlu0 %143, %v114
    %v145 = vpop.permute.xlu0 %144
    %148 = vset.pattern.permute.xlu0 0
    %149 = vperm.xlu0 %148, %v115
    %v150 = vpop.permute.xlu0 %149
    %153 = vset.pattern.permute.xlu0 0
    %154 = vperm.xlu0 %153, %v116
    %v155 = vpop.permute.xlu0 %154
    %158 = vset.pattern.permute.xlu0 0
    %159 = vperm.xlu0 %158, %v117
    %v160 = vpop.permute.xlu0 %159
    %163 = vset.pattern.permute.xlu0 0
    %164 = vperm.xlu0 %163, %v118
    %v165 = vpop.permute.xlu0 %164
    %168 = vset.pattern.permute.xlu0 0
    %169 = vperm.xlu0 %168, %v119
    %v170 = vpop.permute.xlu0 %169
    %173 = vset.pattern.permute.xlu0 0
    %174 = vperm.xlu0 %173, %v120
    %v175 = vpop.permute.xlu0 %174
    %178 = vset.pattern.permute.xlu0 0
    %179 = vperm.xlu0 %178, %v121
    %v180 = vpop.permute.xlu0 %179
    %183 = vset.pattern.permute.xlu0 0
    %184 = vperm.xlu0 %183, %v122
    %v185 = vpop.permute.xlu0 %184
    %188 = vset.pattern.permute.xlu0 0
    %189 = vperm.xlu0 %188, %v123
    %v190 = vpop.permute.xlu0 %189
    %193 = vset.pattern.permute.xlu0 0
    %194 = vperm.xlu0 %193, %v124
    %v195 = vpop.permute.xlu0 %194
    %198 = vset.pattern.permute.xlu0 0
    %199 = vperm.xlu0 %198, %v125
    %v200 = vpop.permute.xlu0 %199
    %203 = vset.pattern.permute.xlu0 0
    %204 = vperm.xlu0 %203, %v126
    %v205 = vpop.permute.xlu0 %204
    %208 = vset.pattern.permute.xlu0 0
    %209 = vperm.xlu0 %208, %v127
    %v210 = vpop.permute.xlu0 %209
    %213 = vset.pattern.permute.xlu0 0
    %214 = vperm.xlu0 %213, %v128
    %v215 = vpop.permute.xlu0 %214
    %218 = vset.pattern.permute.xlu0 0
    %219 = vperm.xlu0 %218, %v129
    %v220 = vpop.permute.xlu0 %219
    %223 = vset.pattern.permute.xlu0 0
    %224 = vperm.xlu0 %223, %v130
    %v225 = vpop.permute.xlu0 %224
    %228 = vset.pattern.permute.xlu0 0
    %229 = vperm.xlu0 %228, %v131
    %v230 = vpop.permute.xlu0 %229
    %v252 = vunpack.c.l.b16 %v92
    %v253 = vunpack.c.l.b16 %v93
    %v254 = vunpack.c.l.b16 %v94
    %v255 = vunpack.c.l.b16 %v95
    %v256 = vunpack.c.l.b16 %v96
    %v257 = vunpack.c.l.b16 %v97
    %v258 = vunpack.c.l.b16 %v98
    %v259 = vunpack.c.l.b16 %v99
    %v260 = vunpack.c.l.b16 %v100
    %v261 = vunpack.c.l.b16 %v101
    %v262 = vunpack.c.l.b16 %v102
    %v263 = vunpack.c.l.b16 %v103
    %v264 = vunpack.c.l.b16 %v104
    %v265 = vunpack.c.l.b16 %v105
    %v266 = vunpack.c.l.b16 %v106
    %v267 = vunpack.c.l.b16 %v107
    %v268 = vunpack.c.l.b16 %v108
    %v269 = vunpack.c.l.b16 %v109
    %v270 = vunpack.c.l.b16 %v110
    %v271 = vunpack.c.l.b16 %v111
    %v272 = vpack.c.b16 %v253, %v252
    %v273 = vpack.c.b16 %v255, %v254
    %v274 = vpack.c.b16 %v257, %v256
    %v275 = vpack.c.b16 %v259, %v258
    %v276 = vpack.c.b16 %v261, %v260
    %v277 = vpack.c.b16 %v263, %v262
    %v278 = vpack.c.b16 %v265, %v264
    %v279 = vpack.c.b16 %v267, %v266
    %v280 = vpack.c.b16 %v269, %v268
    %v281 = vpack.c.b16 %v271, %v270
    %292 = vmatprep.subr.bf16.mxu0 0
    %293 = vmatpush1.bf16.msra.mxu0 %v91
    %294 = vmatprep.subr.bf16.mxu0 0
    %295 = vmatpush1.bf16.msra.mxu0 %v90
    %296 = vmatprep.subr.bf16.mxu0 0
    %297 = vmatpush1.bf16.msra.mxu0 %v89
    %298 = vmatprep.subr.bf16.mxu0 0
    %299 = vmatpush1.bf16.msra.mxu0 %v88
    %300 = vmatprep.subr.bf16.mxu0 0
    %301 = vmatpush1.bf16.msra.mxu0 %v87
    %302 = vmatprep.subr.bf16.mxu0 0
    %303 = vmatpush1.bf16.msra.mxu0 %v86
    %304 = vmatprep.subr.bf16.mxu0 0
    %305 = vmatpush1.bf16.msra.mxu0 %v85
    %306 = vmatprep.subr.bf16.mxu0 0
    %307 = vmatpush1.bf16.msra.mxu0 %v84
    %308 = vmatprep.subr.bf16.mxu0 0
    %309 = vmatpush2.bf16.msra.mxu0 0
    %310 = vmatprep.subr.bf16.mxu0 0
    %311 = vmatpush2.bf16.msra.mxu0 0
    %312 = vmatprep.subr.bf16.mxu0 0
    %313 = vmatpush2.bf16.msra.mxu0 0
    %314 = vmatprep.subr.bf16.mxu0 0
    %315 = vmatpush2.bf16.msra.mxu0 0
    %316 = vmatprep.subr.bf16.mxu0 0
    %317 = vmatpush2.bf16.msra.mxu0 0
    %318 = vmatprep.subr.bf16.mxu0 0
    %319 = vmatpush2.bf16.msra.mxu0 0
    %320 = vmatprep.subr.bf16.mxu0 0
    %321 = vmatpush2.bf16.msra.mxu0 0
    %322 = vmatprep.subr.bf16.mxu0 0
    %323 = vmatpush2.bf16.msra.mxu0 0
    %324 = vmatprep.mubr.bf16.mxu0 0
    %325 = vmatmul.mubr.bf16.gmra.mxu0 %v272
    %v326 = vpop.f32.mrf.mxu0
    %v327 = vadd.f32 %v135, %v326
    %v328 = vpop.f32.mrf.mxu0
    %v329 = vpop.f32.mrf.mxu0
    %v330 = vadd.f32 %v140, %v329
    %v331 = vpop.f32.mrf.mxu0
    %332 = vmatprep.mubr.bf16.mxu0 0
    %333 = vmatmul.mubr.bf16.gmra.mxu0 %v273
    %v334 = vpop.f32.mrf.mxu0
    %v335 = vadd.f32 %v145, %v334
    %v336 = vpop.f32.mrf.mxu0
    %v337 = vpop.f32.mrf.mxu0
    %v338 = vadd.f32 %v150, %v337
    %v339 = vpop.f32.mrf.mxu0
    %340 = vmatprep.mubr.bf16.mxu0 0
    %341 = vmatmul.mubr.bf16.gmra.mxu0 %v274
    %v342 = vpop.f32.mrf.mxu0
    %v343 = vadd.f32 %v155, %v342
    %v344 = vpop.f32.mrf.mxu0
    %v345 = vpop.f32.mrf.mxu0
    %v346 = vadd.f32 %v160, %v345
    %v347 = vpop.f32.mrf.mxu0
    %348 = vmatprep.mubr.bf16.mxu0 0
    %349 = vmatmul.mubr.bf16.gmra.mxu0 %v275
    %v350 = vpop.f32.mrf.mxu0
    %v351 = vadd.f32 %v165, %v350
    %v352 = vpop.f32.mrf.mxu0
    %v353 = vpop.f32.mrf.mxu0
    %v354 = vadd.f32 %v170, %v353
    %v355 = vpop.f32.mrf.mxu0
    %356 = vmatprep.mubr.bf16.mxu0 0
    %357 = vmatmul.mubr.bf16.gmra.mxu0 %v276
    %v358 = vpop.f32.mrf.mxu0
    %v359 = vadd.f32 %v175, %v358
    %v360 = vpop.f32.mrf.mxu0
    %v361 = vpop.f32.mrf.mxu0
    %v362 = vadd.f32 %v180, %v361
    %v363 = vpop.f32.mrf.mxu0
    %364 = vmatprep.mubr.bf16.mxu0 0
    %365 = vmatmul.mubr.bf16.gmra.mxu0 %v277
    %v366 = vpop.f32.mrf.mxu0
    %v367 = vadd.f32 %v185, %v366
    %v368 = vpop.f32.mrf.mxu0
    %v369 = vpop.f32.mrf.mxu0
    %v370 = vadd.f32 %v190, %v369
    %v371 = vpop.f32.mrf.mxu0
    %372 = vmatprep.mubr.bf16.mxu0 0
    %373 = vmatmul.mubr.bf16.gmra.mxu0 %v278
    %v374 = vpop.f32.mrf.mxu0
    %v375 = vadd.f32 %v195, %v374
    %v376 = vpop.f32.mrf.mxu0
    %v377 = vpop.f32.mrf.mxu0
    %v378 = vadd.f32 %v200, %v377
    %v379 = vpop.f32.mrf.mxu0
    %380 = vmatprep.mubr.bf16.mxu0 0
    %381 = vmatmul.mubr.bf16.gmra.mxu0 %v279
    %v382 = vpop.f32.mrf.mxu0
    %v383 = vadd.f32 %v205, %v382
    %v384 = vpop.f32.mrf.mxu0
    %v385 = vpop.f32.mrf.mxu0
    %v386 = vadd.f32 %v210, %v385
    %v387 = vpop.f32.mrf.mxu0
    %388 = vmatprep.mubr.bf16.mxu0 0
    %389 = vmatmul.mubr.bf16.gmra.mxu0 %v280
    %v390 = vpop.f32.mrf.mxu0
    %v391 = vadd.f32 %v215, %v390
    %v392 = vpop.f32.mrf.mxu0
    %v393 = vpop.f32.mrf.mxu0
    %v394 = vadd.f32 %v220, %v393
    %v395 = vpop.f32.mrf.mxu0
    %396 = vmatprep.mubr.bf16.mxu0 0
    %397 = vmatmul.mubr.bf16.gmra.mxu0 %v281
    %v398 = vpop.f32.mrf.mxu0
    %v399 = vadd.f32 %v225, %v398
    %v400 = vpop.f32.mrf.mxu0
    %v401 = vpop.f32.mrf.mxu0
    %v402 = vadd.f32 %v230, %v401
    %v403 = vpop.f32.mrf.mxu0
    %404 = vdwg.mxu0
    %v405 = vmul.f32 %v327, 0.5
    %v406 = vmul.f32 %v330, 0.5
    %v407 = vmul.f32 %v335, 0.5
    %v408 = vmul.f32 %v338, 0.5
    %v409 = vmul.f32 %v343, 0.5
    %v410 = vmul.f32 %v346, 0.5
    %v411 = vmul.f32 %v351, 0.5
    %v412 = vmul.f32 %v354, 0.5
    %v413 = vmul.f32 %v359, 0.5
    %v414 = vmul.f32 %v362, 0.5
    %v415 = vmul.f32 %v367, 0.5
    %v416 = vmul.f32 %v370, 0.5
    %v417 = vmul.f32 %v375, 0.5
    %v418 = vmul.f32 %v378, 0.5
    %v419 = vmul.f32 %v383, 0.5
    %v420 = vmul.f32 %v386, 0.5
    %v421 = vmul.f32 %v391, 0.5
    %v422 = vmul.f32 %v394, 0.5
    %v423 = vmul.f32 %v399, 0.5
    %v424 = vmul.f32 %v402, 0.5
    %v425 = vtanh.pop %v405
    %v426 = vtanh.pop %v406
    %v427 = vtanh.pop %v407
    %v428 = vtanh.pop %v408
    %v429 = vtanh.pop %v409
    %v430 = vtanh.pop %v410
    %v431 = vtanh.pop %v411
    %v432 = vtanh.pop %v412
    %v433 = vtanh.pop %v413
    %v434 = vtanh.pop %v414
    %v435 = vtanh.pop %v415
    %v436 = vtanh.pop %v416
    %v437 = vtanh.pop %v417
    %v438 = vtanh.pop %v418
    %v439 = vtanh.pop %v419
    %v440 = vtanh.pop %v420
    %v441 = vtanh.pop %v421
    %v442 = vtanh.pop %v422
    %v443 = vtanh.pop %v423
    %v444 = vtanh.pop %v424
    %v445 = vmul.f32 %v425, 0.5
    %v446 = vmul.f32 %v426, 0.5
    %v447 = vmul.f32 %v427, 0.5
    %v448 = vmul.f32 %v428, 0.5
    %v449 = vmul.f32 %v429, 0.5
    %v450 = vmul.f32 %v430, 0.5
    %v451 = vmul.f32 %v431, 0.5
    %v452 = vmul.f32 %v432, 0.5
    %v453 = vmul.f32 %v433, 0.5
    %v454 = vmul.f32 %v434, 0.5
    %v455 = vmul.f32 %v435, 0.5
    %v456 = vmul.f32 %v436, 0.5
    %v457 = vmul.f32 %v437, 0.5
    %v458 = vmul.f32 %v438, 0.5
    %v459 = vmul.f32 %v439, 0.5
    %v460 = vmul.f32 %v440, 0.5
    %v461 = vmul.f32 %v441, 0.5
    %v462 = vmul.f32 %v442, 0.5
    %v463 = vmul.f32 %v443, 0.5
    %v464 = vmul.f32 %v444, 0.5
    %v465 = vadd.f32 %v445, 0.5
    %v466 = vadd.f32 %v446, 0.5
    %v467 = vadd.f32 %v447, 0.5
    %v468 = vadd.f32 %v448, 0.5
    %v469 = vadd.f32 %v449, 0.5
    %v470 = vadd.f32 %v450, 0.5
    %v471 = vadd.f32 %v451, 0.5
    %v472 = vadd.f32 %v452, 0.5
    %v473 = vadd.f32 %v453, 0.5
    %v474 = vadd.f32 %v454, 0.5
    %v475 = vadd.f32 %v455, 0.5
    %v476 = vadd.f32 %v456, 0.5
    %v477 = vadd.f32 %v457, 0.5
    %v478 = vadd.f32 %v458, 0.5
    %v479 = vadd.f32 %v459, 0.5
    %v480 = vadd.f32 %v460, 0.5
    %v481 = vadd.f32 %v461, 0.5
    %v482 = vadd.f32 %v462, 0.5
    %v483 = vadd.f32 %v463, 0.5
    %v484 = vadd.f32 %v464, 0.5
    %v485 = vld [vmem:[%s3] sm:$0xff]
    %v486 = vld [vmem:[%s3 + $0x8] sm:$0xff]
    %v487 = vld [vmem:[%s3 + $0x10] sm:$0xff]
    %v488 = vld [vmem:[%s3 + $0x18] sm:$0xff]
    %v489 = vld [vmem:[%s3 + $0x20] sm:$0xff]
    %v490 = vld [vmem:[%s3 + $0x28] sm:$0xff]
    %v491 = vld [vmem:[%s3 + $0x30] sm:$0xff]
    %v492 = vld [vmem:[%s3 + $0x38] sm:$0xff]
    %v493 = vld [vmem:[%s3 + $0x40] sm:$0xff]
    %v494 = vld [vmem:[%s3 + $0x48] sm:$0xff]
    %v495 = vld [vmem:[%s3 + $0x50] sm:$0xff]
    %v496 = vld [vmem:[%s3 + $0x58] sm:$0xff]
    %v497 = vld [vmem:[%s3 + $0x60] sm:$0xff]
    %v498 = vld [vmem:[%s3 + $0x68] sm:$0xff]
    %v499 = vld [vmem:[%s3 + $0x70] sm:$0xff]
    %v500 = vld [vmem:[%s3 + $0x78] sm:$0xff]
    %v501 = vld [vmem:[%s3 + $0x80] sm:$0xff]
    %v502 = vld [vmem:[%s3 + $0x88] sm:$0xff]
    %v503 = vld [vmem:[%s3 + $0x90] sm:$0xff]
    %v504 = vld [vmem:[%s3 + $0x98] sm:$0xff]
    %v505 = vpack.c.bf16 %v466, %v465
    %v506 = vpack.c.bf16 %v468, %v467
    %v507 = vpack.c.bf16 %v470, %v469
    %v508 = vpack.c.bf16 %v472, %v471
    %v509 = vpack.c.bf16 %v474, %v473
    %v510 = vpack.c.bf16 %v476, %v475
    %v511 = vpack.c.bf16 %v478, %v477
    %v512 = vpack.c.bf16 %v480, %v479
    %v513 = vpack.c.bf16 %v482, %v481
    %v514 = vpack.c.bf16 %v484, %v483
    %v515 = vld [vmem:[%s4] sm:$0xff]
    %v516 = vld [vmem:[%s4 + $0x8] sm:$0xff]
    %v517 = vld [vmem:[%s4 + $0x10] sm:$0xff]
    %v518 = vld [vmem:[%s4 + $0x18] sm:$0xff]
    %v519 = vld [vmem:[%s4 + $0x20] sm:$0xff]
    %v520 = vld [vmem:[%s4 + $0x28] sm:$0xff]
    %v521 = vld [vmem:[%s4 + $0x30] sm:$0xff]
    %v522 = vld [vmem:[%s4 + $0x38] sm:$0xff]
    %v523 = vld [vmem:[%s4 + $0x40] sm:$0xff]
    %v524 = vld [vmem:[%s4 + $0x48] sm:$0xff]
    %v525 = vld [vmem:[%s4 + $0x50] sm:$0xff]
    %v526 = vld [vmem:[%s4 + $0x58] sm:$0xff]
    %v527 = vld [vmem:[%s4 + $0x60] sm:$0xff]
    %v528 = vld [vmem:[%s4 + $0x68] sm:$0xff]
    %v529 = vld [vmem:[%s4 + $0x70] sm:$0xff]
    %v530 = vld [vmem:[%s4 + $0x78] sm:$0xff]
    %v531 = vld [vmem:[%s4 + $0x80] sm:$0xff]
    %v532 = vld [vmem:[%s4 + $0x88] sm:$0xff]
    %v533 = vld [vmem:[%s4 + $0x90] sm:$0xff]
    %v534 = vld [vmem:[%s4 + $0x98] sm:$0xff]
    %536 = vset.pattern.permute.xlu0 0
    %537 = vperm.xlu0 %536, %v515
    %v538 = vpop.permute.xlu0 %537
    %541 = vset.pattern.permute.xlu0 0
    %542 = vperm.xlu0 %541, %v516
    %v543 = vpop.permute.xlu0 %542
    %546 = vset.pattern.permute.xlu0 0
    %547 = vperm.xlu0 %546, %v517
    %v548 = vpop.permute.xlu0 %547
    %551 = vset.pattern.permute.xlu0 0
    %552 = vperm.xlu0 %551, %v518
    %v553 = vpop.permute.xlu0 %552
    %556 = vset.pattern.permute.xlu0 0
    %557 = vperm.xlu0 %556, %v519
    %v558 = vpop.permute.xlu0 %557
    %561 = vset.pattern.permute.xlu0 0
    %562 = vperm.xlu0 %561, %v520
    %v563 = vpop.permute.xlu0 %562
    %566 = vset.pattern.permute.xlu0 0
    %567 = vperm.xlu0 %566, %v521
    %v568 = vpop.permute.xlu0 %567
    %571 = vset.pattern.permute.xlu0 0
    %572 = vperm.xlu0 %571, %v522
    %v573 = vpop.permute.xlu0 %572
    %576 = vset.pattern.permute.xlu0 0
    %577 = vperm.xlu0 %576, %v523
    %v578 = vpop.permute.xlu0 %577
    %581 = vset.pattern.permute.xlu0 0
    %582 = vperm.xlu0 %581, %v524
    %v583 = vpop.permute.xlu0 %582
    %586 = vset.pattern.permute.xlu0 0
    %587 = vperm.xlu0 %586, %v525
    %v588 = vpop.permute.xlu0 %587
    %591 = vset.pattern.permute.xlu0 0
    %592 = vperm.xlu0 %591, %v526
    %v593 = vpop.permute.xlu0 %592
    %596 = vset.pattern.permute.xlu0 0
    %597 = vperm.xlu0 %596, %v527
    %v598 = vpop.permute.xlu0 %597
    %601 = vset.pattern.permute.xlu0 0
    %602 = vperm.xlu0 %601, %v528
    %v603 = vpop.permute.xlu0 %602
    %606 = vset.pattern.permute.xlu0 0
    %607 = vperm.xlu0 %606, %v529
    %v608 = vpop.permute.xlu0 %607
    %611 = vset.pattern.permute.xlu0 0
    %612 = vperm.xlu0 %611, %v530
    %v613 = vpop.permute.xlu0 %612
    %616 = vset.pattern.permute.xlu0 0
    %617 = vperm.xlu0 %616, %v531
    %v618 = vpop.permute.xlu0 %617
    %621 = vset.pattern.permute.xlu0 0
    %622 = vperm.xlu0 %621, %v532
    %v623 = vpop.permute.xlu0 %622
    %626 = vset.pattern.permute.xlu0 0
    %627 = vperm.xlu0 %626, %v533
    %v628 = vpop.permute.xlu0 %627
    %631 = vset.pattern.permute.xlu0 0
    %632 = vperm.xlu0 %631, %v534
    %v633 = vpop.permute.xlu0 %632
    %v655 = vunpack.c.l.b16 %v485
    %v656 = vunpack.c.h.b16 %v485
    %v657 = vunpack.c.l.b16 %v486
    %v658 = vunpack.c.h.b16 %v486
    %v659 = vunpack.c.l.b16 %v487
    %v660 = vunpack.c.h.b16 %v487
    %v661 = vunpack.c.l.b16 %v488
    %v662 = vunpack.c.h.b16 %v488
    %v663 = vunpack.c.l.b16 %v489
    %v664 = vunpack.c.h.b16 %v489
    %v665 = vunpack.c.l.b16 %v490
    %v666 = vunpack.c.h.b16 %v490
    %v667 = vunpack.c.l.b16 %v491
    %v668 = vunpack.c.h.b16 %v491
    %v669 = vunpack.c.l.b16 %v492
    %v670 = vunpack.c.h.b16 %v492
    %v671 = vunpack.c.l.b16 %v493
    %v672 = vunpack.c.h.b16 %v493
    %v673 = vunpack.c.l.b16 %v494
    %v674 = vunpack.c.h.b16 %v494
    %v675 = vunpack.c.l.b16 %v495
    %v676 = vunpack.c.h.b16 %v495
    %v677 = vunpack.c.l.b16 %v496
    %v678 = vunpack.c.h.b16 %v496
    %v679 = vunpack.c.l.b16 %v497
    %v680 = vunpack.c.h.b16 %v497
    %v681 = vunpack.c.l.b16 %v498
    %v682 = vunpack.c.h.b16 %v498
    %v683 = vunpack.c.l.b16 %v499
    %v684 = vunpack.c.h.b16 %v499
    %v685 = vunpack.c.l.b16 %v500
    %v686 = vunpack.c.h.b16 %v500
    %v687 = vunpack.c.l.b16 %v501
    %v688 = vunpack.c.h.b16 %v501
    %v689 = vunpack.c.l.b16 %v502
    %v690 = vunpack.c.h.b16 %v502
    %v691 = vunpack.c.l.b16 %v503
    %v692 = vunpack.c.h.b16 %v503
    %v693 = vunpack.c.l.b16 %v504
    %v694 = vunpack.c.h.b16 %v504
    %v695 = vpack.c.b16 %v657, %v655
    %v696 = vpack.c.b16 %v658, %v656
    %v697 = vpack.c.b16 %v661, %v659
    %v698 = vpack.c.b16 %v662, %v660
    %v699 = vpack.c.b16 %v665, %v663
    %v700 = vpack.c.b16 %v666, %v664
    %v701 = vpack.c.b16 %v669, %v667
    %v702 = vpack.c.b16 %v670, %v668
    %v703 = vpack.c.b16 %v673, %v671
    %v704 = vpack.c.b16 %v674, %v672
    %v705 = vpack.c.b16 %v677, %v675
    %v706 = vpack.c.b16 %v678, %v676
    %v707 = vpack.c.b16 %v681, %v679
    %v708 = vpack.c.b16 %v682, %v680
    %v709 = vpack.c.b16 %v685, %v683
    %v710 = vpack.c.b16 %v686, %v684
    %v711 = vpack.c.b16 %v689, %v687
    %v712 = vpack.c.b16 %v690, %v688
    %v713 = vpack.c.b16 %v693, %v691
    %v714 = vpack.c.b16 %v694, %v692
    %vm725 = vcmask 261120
    %v727 = vsel %vm725, %v696, 0
    %v730 = vsel %vm725, %v698, 0
    %v733 = vsel %vm725, %v700, 0
    %v736 = vsel %vm725, %v702, 0
    %v739 = vsel %vm725, %v704, 0
    %v742 = vsel %vm725, %v706, 0
    %v745 = vsel %vm725, %v708, 0
    %v748 = vsel %vm725, %v710, 0
    %v751 = vsel %vm725, %v712, 0
    %v754 = vsel %vm725, %v714, 0
    %756 = vmatprep.subr.bf16.mxu0 0
    %757 = vmatpush1.bf16.msra.mxu0 %v512
    %758 = vmatprep.subr.bf16.mxu0 0
    %759 = vmatpush1.bf16.msra.mxu0 %v511
    %760 = vmatprep.subr.bf16.mxu0 0
    %761 = vmatpush1.bf16.msra.mxu0 %v510
    %762 = vmatprep.subr.bf16.mxu0 0
    %763 = vmatpush1.bf16.msra.mxu0 %v509
    %764 = vmatprep.subr.bf16.mxu0 0
    %765 = vmatpush1.bf16.msra.mxu0 %v508
    %766 = vmatprep.subr.bf16.mxu0 0
    %767 = vmatpush1.bf16.msra.mxu0 %v507
    %768 = vmatprep.subr.bf16.mxu0 0
    %769 = vmatpush1.bf16.msra.mxu0 %v506
    %770 = vmatprep.subr.bf16.mxu0 0
    %771 = vmatpush1.bf16.msra.mxu0 %v505
    %772 = vmatprep.subr.bf16.mxu0 0
    %773 = vmatpush2.bf16.msra.mxu0 0
    %774 = vmatprep.subr.bf16.mxu0 0
    %775 = vmatpush2.bf16.msra.mxu0 0
    %776 = vmatprep.subr.bf16.mxu0 0
    %777 = vmatpush2.bf16.msra.mxu0 0
    %778 = vmatprep.subr.bf16.mxu0 0
    %779 = vmatpush2.bf16.msra.mxu0 0
    %780 = vmatprep.subr.bf16.mxu0 0
    %781 = vmatpush2.bf16.msra.mxu0 0
    %782 = vmatprep.subr.bf16.mxu0 0
    %783 = vmatpush2.bf16.msra.mxu0 0
    %784 = vmatprep.subr.bf16.mxu0 0
    %785 = vmatpush2.bf16.msra.mxu0 %v514
    %786 = vmatprep.subr.bf16.mxu0 0
    %787 = vmatpush2.bf16.msra.mxu0 %v513
    %788 = vmatprep.mubr.bf16.mxu0 %v727
    %789 = vmatmul.mubr.bf16.gmra.mxu0 %v695
    %v790 = vpop.f32.mrf.mxu0
    %v791 = vadd.f32 %v538, %v790
    %v792 = vpop.f32.mrf.mxu0
    %v793 = vpop.f32.mrf.mxu0
    %v794 = vadd.f32 %v543, %v793
    %v795 = vpop.f32.mrf.mxu0
    %796 = vmatprep.mubr.bf16.mxu0 %v730
    %797 = vmatmul.mubr.bf16.gmra.mxu0 %v697
    %v798 = vpop.f32.mrf.mxu0
    %v799 = vadd.f32 %v548, %v798
    %v800 = vpop.f32.mrf.mxu0
    %v801 = vpop.f32.mrf.mxu0
    %v802 = vadd.f32 %v553, %v801
    %v803 = vpop.f32.mrf.mxu0
    %804 = vmatprep.mubr.bf16.mxu0 %v733
    %805 = vmatmul.mubr.bf16.gmra.mxu0 %v699
    %v806 = vpop.f32.mrf.mxu0
    %v807 = vadd.f32 %v558, %v806
    %v808 = vpop.f32.mrf.mxu0
    %v809 = vpop.f32.mrf.mxu0
    %v810 = vadd.f32 %v563, %v809
    %v811 = vpop.f32.mrf.mxu0
    %812 = vmatprep.mubr.bf16.mxu0 %v736
    %813 = vmatmul.mubr.bf16.gmra.mxu0 %v701
    %v814 = vpop.f32.mrf.mxu0
    %v815 = vadd.f32 %v568, %v814
    %v816 = vpop.f32.mrf.mxu0
    %v817 = vpop.f32.mrf.mxu0
    %v818 = vadd.f32 %v573, %v817
    %v819 = vpop.f32.mrf.mxu0
    %820 = vmatprep.mubr.bf16.mxu0 %v739
    %821 = vmatmul.mubr.bf16.gmra.mxu0 %v703
    %v822 = vpop.f32.mrf.mxu0
    %v823 = vadd.f32 %v578, %v822
    %v824 = vpop.f32.mrf.mxu0
    %v825 = vpop.f32.mrf.mxu0
    %v826 = vadd.f32 %v583, %v825
    %v827 = vpop.f32.mrf.mxu0
    %828 = vmatprep.mubr.bf16.mxu0 %v742
    %829 = vmatmul.mubr.bf16.gmra.mxu0 %v705
    %v830 = vpop.f32.mrf.mxu0
    %v831 = vadd.f32 %v588, %v830
    %v832 = vpop.f32.mrf.mxu0
    %v833 = vpop.f32.mrf.mxu0
    %v834 = vadd.f32 %v593, %v833
    %v835 = vpop.f32.mrf.mxu0
    %836 = vmatprep.mubr.bf16.mxu0 %v745
    %837 = vmatmul.mubr.bf16.gmra.mxu0 %v707
    %v838 = vpop.f32.mrf.mxu0
    %v839 = vadd.f32 %v598, %v838
    %v840 = vpop.f32.mrf.mxu0
    %v841 = vpop.f32.mrf.mxu0
    %v842 = vadd.f32 %v603, %v841
    %v843 = vpop.f32.mrf.mxu0
    %844 = vmatprep.mubr.bf16.mxu0 %v748
    %845 = vmatmul.mubr.bf16.gmra.mxu0 %v709
    %v846 = vpop.f32.mrf.mxu0
    %v847 = vadd.f32 %v608, %v846
    %v848 = vpop.f32.mrf.mxu0
    %v849 = vpop.f32.mrf.mxu0
    %v850 = vadd.f32 %v613, %v849
    %v851 = vpop.f32.mrf.mxu0
    %852 = vmatprep.mubr.bf16.mxu0 %v751
    %853 = vmatmul.mubr.bf16.gmra.mxu0 %v711
    %v854 = vpop.f32.mrf.mxu0
    %v855 = vadd.f32 %v618, %v854
    %v856 = vpop.f32.mrf.mxu0
    %v857 = vpop.f32.mrf.mxu0
    %v858 = vadd.f32 %v623, %v857
    %v859 = vpop.f32.mrf.mxu0
    %860 = vmatprep.mubr.bf16.mxu0 %v754
    %861 = vmatmul.mubr.bf16.gmra.mxu0 %v713
    %v862 = vpop.f32.mrf.mxu0
    %v863 = vadd.f32 %v628, %v862
    %v864 = vpop.f32.mrf.mxu0
    %v865 = vpop.f32.mrf.mxu0
    %v866 = vadd.f32 %v633, %v865
    %v867 = vpop.f32.mrf.mxu0
    %868 = vdwg.mxu0
    %v869 = vmul.f32 %v791, 0.5
    %v870 = vmul.f32 %v794, 0.5
    %v871 = vmul.f32 %v799, 0.5
    %v872 = vmul.f32 %v802, 0.5
    %v873 = vmul.f32 %v807, 0.5
    %v874 = vmul.f32 %v810, 0.5
    %v875 = vmul.f32 %v815, 0.5
    %v876 = vmul.f32 %v818, 0.5
    %v877 = vmul.f32 %v823, 0.5
    %v878 = vmul.f32 %v826, 0.5
    %v879 = vmul.f32 %v831, 0.5
    %v880 = vmul.f32 %v834, 0.5
    %v881 = vmul.f32 %v839, 0.5
    %v882 = vmul.f32 %v842, 0.5
    %v883 = vmul.f32 %v847, 0.5
    %v884 = vmul.f32 %v850, 0.5
    %v885 = vmul.f32 %v855, 0.5
    %v886 = vmul.f32 %v858, 0.5
    %v887 = vmul.f32 %v863, 0.5
    %v888 = vmul.f32 %v866, 0.5
    %v889 = vtanh.pop %v869
    %v890 = vtanh.pop %v870
    %v891 = vtanh.pop %v871
    %v892 = vtanh.pop %v872
    %v893 = vtanh.pop %v873
    %v894 = vtanh.pop %v874
    %v895 = vtanh.pop %v875
    %v896 = vtanh.pop %v876
    %v897 = vtanh.pop %v877
    %v898 = vtanh.pop %v878
    %v899 = vtanh.pop %v879
    %v900 = vtanh.pop %v880
    %v901 = vtanh.pop %v881
    %v902 = vtanh.pop %v882
    %v903 = vtanh.pop %v883
    %v904 = vtanh.pop %v884
    %v905 = vtanh.pop %v885
    %v906 = vtanh.pop %v886
    %v907 = vtanh.pop %v887
    %v908 = vtanh.pop %v888
    %v909 = vmul.f32 %v889, 0.5
    %v910 = vmul.f32 %v890, 0.5
    %v911 = vmul.f32 %v891, 0.5
    %v912 = vmul.f32 %v892, 0.5
    %v913 = vmul.f32 %v893, 0.5
    %v914 = vmul.f32 %v894, 0.5
    %v915 = vmul.f32 %v895, 0.5
    %v916 = vmul.f32 %v896, 0.5
    %v917 = vmul.f32 %v897, 0.5
    %v918 = vmul.f32 %v898, 0.5
    %v919 = vmul.f32 %v899, 0.5
    %v920 = vmul.f32 %v900, 0.5
    %v921 = vmul.f32 %v901, 0.5
    %v922 = vmul.f32 %v902, 0.5
    %v923 = vmul.f32 %v903, 0.5
    %v924 = vmul.f32 %v904, 0.5
    %v925 = vmul.f32 %v905, 0.5
    %v926 = vmul.f32 %v906, 0.5
    %v927 = vmul.f32 %v907, 0.5
    %v928 = vmul.f32 %v908, 0.5
    %v929 = vadd.f32 %v909, 0.5
    %v930 = vadd.f32 %v910, 0.5
    %v931 = vadd.f32 %v911, 0.5
    %v932 = vadd.f32 %v912, 0.5
    %v933 = vadd.f32 %v913, 0.5
    %v934 = vadd.f32 %v914, 0.5
    %v935 = vadd.f32 %v915, 0.5
    %v936 = vadd.f32 %v916, 0.5
    %v937 = vadd.f32 %v917, 0.5
    %v938 = vadd.f32 %v918, 0.5
    %v939 = vadd.f32 %v919, 0.5
    %v940 = vadd.f32 %v920, 0.5
    %v941 = vadd.f32 %v921, 0.5
    %v942 = vadd.f32 %v922, 0.5
    %v943 = vadd.f32 %v923, 0.5
    %v944 = vadd.f32 %v924, 0.5
    %v945 = vadd.f32 %v925, 0.5
    %v946 = vadd.f32 %v926, 0.5
    %v947 = vadd.f32 %v927, 0.5
    %v948 = vadd.f32 %v928, 0.5
    %v949 = vld [vmem:[%s5] sm:$0xff]
    %v950 = vld [vmem:[%s5 + $0x8] sm:$0xff]
    %v951 = vld [vmem:[%s5 + $0x10] sm:$0xff]
    %v952 = vld [vmem:[%s5 + $0x18] sm:$0xff]
    %v953 = vld [vmem:[%s5 + $0x20] sm:$0xff]
    %v954 = vld [vmem:[%s5 + $0x28] sm:$0xff]
    %v955 = vld [vmem:[%s5 + $0x30] sm:$0xff]
    %v956 = vld [vmem:[%s5 + $0x38] sm:$0xff]
    %v957 = vld [vmem:[%s5 + $0x40] sm:$0xff]
    %v958 = vld [vmem:[%s5 + $0x48] sm:$0xff]
    %v959 = vld [vmem:[%s5 + $0x50] sm:$0xff]
    %v960 = vld [vmem:[%s5 + $0x58] sm:$0xff]
    %v961 = vld [vmem:[%s5 + $0x60] sm:$0xff]
    %v962 = vld [vmem:[%s5 + $0x68] sm:$0xff]
    %v963 = vld [vmem:[%s5 + $0x70] sm:$0xff]
    %v964 = vld [vmem:[%s5 + $0x78] sm:$0xff]
    %v965 = vld [vmem:[%s5 + $0x80] sm:$0xff]
    %v966 = vld [vmem:[%s5 + $0x88] sm:$0xff]
    %v967 = vld [vmem:[%s5 + $0x90] sm:$0xff]
    %v968 = vld [vmem:[%s5 + $0x98] sm:$0xff]
    %v969 = vpack.c.bf16 %v930, %v929
    %v970 = vpack.c.bf16 %v932, %v931
    %v971 = vpack.c.bf16 %v934, %v933
    %v972 = vpack.c.bf16 %v936, %v935
    %v973 = vpack.c.bf16 %v938, %v937
    %v974 = vpack.c.bf16 %v940, %v939
    %v975 = vpack.c.bf16 %v942, %v941
    %v976 = vpack.c.bf16 %v944, %v943
    %v977 = vpack.c.bf16 %v946, %v945
    %v978 = vpack.c.bf16 %v948, %v947
    %v979 = vld [vmem:[%s6] sm:$0xff]
    %v980 = vld [vmem:[%s6 + $0x8] sm:$0xff]
    %v981 = vld [vmem:[%s6 + $0x10] sm:$0xff]
    %v982 = vld [vmem:[%s6 + $0x18] sm:$0xff]
    %v983 = vld [vmem:[%s6 + $0x20] sm:$0xff]
    %v984 = vld [vmem:[%s6 + $0x28] sm:$0xff]
    %v985 = vld [vmem:[%s6 + $0x30] sm:$0xff]
    %v986 = vld [vmem:[%s6 + $0x38] sm:$0xff]
    %v987 = vld [vmem:[%s6 + $0x40] sm:$0xff]
    %v988 = vld [vmem:[%s6 + $0x48] sm:$0xff]
    %v989 = vld [vmem:[%s6 + $0x50] sm:$0xff]
    %v990 = vld [vmem:[%s6 + $0x58] sm:$0xff]
    %v991 = vld [vmem:[%s6 + $0x60] sm:$0xff]
    %v992 = vld [vmem:[%s6 + $0x68] sm:$0xff]
    %v993 = vld [vmem:[%s6 + $0x70] sm:$0xff]
    %v994 = vld [vmem:[%s6 + $0x78] sm:$0xff]
    %v995 = vld [vmem:[%s6 + $0x80] sm:$0xff]
    %v996 = vld [vmem:[%s6 + $0x88] sm:$0xff]
    %v997 = vld [vmem:[%s6 + $0x90] sm:$0xff]
    %v998 = vld [vmem:[%s6 + $0x98] sm:$0xff]
    %1000 = vset.pattern.permute.xlu0 0
    %1001 = vperm.xlu0 %1000, %v979
    %v1002 = vpop.permute.xlu0 %1001
    %1005 = vset.pattern.permute.xlu0 0
    %1006 = vperm.xlu0 %1005, %v980
    %v1007 = vpop.permute.xlu0 %1006
    %1010 = vset.pattern.permute.xlu0 0
    %1011 = vperm.xlu0 %1010, %v981
    %v1012 = vpop.permute.xlu0 %1011
    %1015 = vset.pattern.permute.xlu0 0
    %1016 = vperm.xlu0 %1015, %v982
    %v1017 = vpop.permute.xlu0 %1016
    %1020 = vset.pattern.permute.xlu0 0
    %1021 = vperm.xlu0 %1020, %v983
    %v1022 = vpop.permute.xlu0 %1021
    %1025 = vset.pattern.permute.xlu0 0
    %1026 = vperm.xlu0 %1025, %v984
    %v1027 = vpop.permute.xlu0 %1026
    %1030 = vset.pattern.permute.xlu0 0
    %1031 = vperm.xlu0 %1030, %v985
    %v1032 = vpop.permute.xlu0 %1031
    %1035 = vset.pattern.permute.xlu0 0
    %1036 = vperm.xlu0 %1035, %v986
    %v1037 = vpop.permute.xlu0 %1036
    %1040 = vset.pattern.permute.xlu0 0
    %1041 = vperm.xlu0 %1040, %v987
    %v1042 = vpop.permute.xlu0 %1041
    %1045 = vset.pattern.permute.xlu0 0
    %1046 = vperm.xlu0 %1045, %v988
    %v1047 = vpop.permute.xlu0 %1046
    %1050 = vset.pattern.permute.xlu0 0
    %1051 = vperm.xlu0 %1050, %v989
    %v1052 = vpop.permute.xlu0 %1051
    %1055 = vset.pattern.permute.xlu0 0
    %1056 = vperm.xlu0 %1055, %v990
    %v1057 = vpop.permute.xlu0 %1056
    %1060 = vset.pattern.permute.xlu0 0
    %1061 = vperm.xlu0 %1060, %v991
    %v1062 = vpop.permute.xlu0 %1061
    %1065 = vset.pattern.permute.xlu0 0
    %1066 = vperm.xlu0 %1065, %v992
    %v1067 = vpop.permute.xlu0 %1066
    %1070 = vset.pattern.permute.xlu0 0
    %1071 = vperm.xlu0 %1070, %v993
    %v1072 = vpop.permute.xlu0 %1071
    %1075 = vset.pattern.permute.xlu0 0
    %1076 = vperm.xlu0 %1075, %v994
    %v1077 = vpop.permute.xlu0 %1076
    %1080 = vset.pattern.permute.xlu0 0
    %1081 = vperm.xlu0 %1080, %v995
    %v1082 = vpop.permute.xlu0 %1081
    %1085 = vset.pattern.permute.xlu0 0
    %1086 = vperm.xlu0 %1085, %v996
    %v1087 = vpop.permute.xlu0 %1086
    %1090 = vset.pattern.permute.xlu0 0
    %1091 = vperm.xlu0 %1090, %v997
    %v1092 = vpop.permute.xlu0 %1091
    %1095 = vset.pattern.permute.xlu0 0
    %1096 = vperm.xlu0 %1095, %v998
    %v1097 = vpop.permute.xlu0 %1096
    %v1119 = vunpack.c.l.b16 %v949
    %v1120 = vunpack.c.h.b16 %v949
    %v1121 = vunpack.c.l.b16 %v950
    %v1122 = vunpack.c.h.b16 %v950
    %v1123 = vunpack.c.l.b16 %v951
    %v1124 = vunpack.c.h.b16 %v951
    %v1125 = vunpack.c.l.b16 %v952
    %v1126 = vunpack.c.h.b16 %v952
    %v1127 = vunpack.c.l.b16 %v953
    %v1128 = vunpack.c.h.b16 %v953
    %v1129 = vunpack.c.l.b16 %v954
    %v1130 = vunpack.c.h.b16 %v954
    %v1131 = vunpack.c.l.b16 %v955
    %v1132 = vunpack.c.h.b16 %v955
    %v1133 = vunpack.c.l.b16 %v956
    %v1134 = vunpack.c.h.b16 %v956
    %v1135 = vunpack.c.l.b16 %v957
    %v1136 = vunpack.c.h.b16 %v957
    %v1137 = vunpack.c.l.b16 %v958
    %v1138 = vunpack.c.h.b16 %v958
    %v1139 = vunpack.c.l.b16 %v959
    %v1140 = vunpack.c.h.b16 %v959
    %v1141 = vunpack.c.l.b16 %v960
    %v1142 = vunpack.c.h.b16 %v960
    %v1143 = vunpack.c.l.b16 %v961
    %v1144 = vunpack.c.h.b16 %v961
    %v1145 = vunpack.c.l.b16 %v962
    %v1146 = vunpack.c.h.b16 %v962
    %v1147 = vunpack.c.l.b16 %v963
    %v1148 = vunpack.c.h.b16 %v963
    %v1149 = vunpack.c.l.b16 %v964
    %v1150 = vunpack.c.h.b16 %v964
    %v1151 = vunpack.c.l.b16 %v965
    %v1152 = vunpack.c.h.b16 %v965
    %v1153 = vunpack.c.l.b16 %v966
    %v1154 = vunpack.c.h.b16 %v966
    %v1155 = vunpack.c.l.b16 %v967
    %v1156 = vunpack.c.h.b16 %v967
    %v1157 = vunpack.c.l.b16 %v968
    %v1158 = vunpack.c.h.b16 %v968
    %v1159 = vpack.c.b16 %v1121, %v1119
    %v1160 = vpack.c.b16 %v1122, %v1120
    %v1161 = vpack.c.b16 %v1125, %v1123
    %v1162 = vpack.c.b16 %v1126, %v1124
    %v1163 = vpack.c.b16 %v1129, %v1127
    %v1164 = vpack.c.b16 %v1130, %v1128
    %v1165 = vpack.c.b16 %v1133, %v1131
    %v1166 = vpack.c.b16 %v1134, %v1132
    %v1167 = vpack.c.b16 %v1137, %v1135
    %v1168 = vpack.c.b16 %v1138, %v1136
    %v1169 = vpack.c.b16 %v1141, %v1139
    %v1170 = vpack.c.b16 %v1142, %v1140
    %v1171 = vpack.c.b16 %v1145, %v1143
    %v1172 = vpack.c.b16 %v1146, %v1144
    %v1173 = vpack.c.b16 %v1149, %v1147
    %v1174 = vpack.c.b16 %v1150, %v1148
    %v1175 = vpack.c.b16 %v1153, %v1151
    %v1176 = vpack.c.b16 %v1154, %v1152
    %v1177 = vpack.c.b16 %v1157, %v1155
    %v1178 = vpack.c.b16 %v1158, %v1156
    %v1190 = vsel %vm725, %v1160, 0
    %v1193 = vsel %vm725, %v1162, 0
    %v1196 = vsel %vm725, %v1164, 0
    %v1199 = vsel %vm725, %v1166, 0
    %v1202 = vsel %vm725, %v1168, 0
    %v1205 = vsel %vm725, %v1170, 0
    %v1208 = vsel %vm725, %v1172, 0
    %v1211 = vsel %vm725, %v1174, 0
    %v1214 = vsel %vm725, %v1176, 0
    %v1217 = vsel %vm725, %v1178, 0
    %1219 = vmatprep.subr.bf16.mxu0 0
    %1220 = vmatpush1.bf16.msra.mxu0 %v976
    %1221 = vmatprep.subr.bf16.mxu0 0
    %1222 = vmatpush1.bf16.msra.mxu0 %v975
    %1223 = vmatprep.subr.bf16.mxu0 0
    %1224 = vmatpush1.bf16.msra.mxu0 %v974
    %1225 = vmatprep.subr.bf16.mxu0 0
    %1226 = vmatpush1.bf16.msra.mxu0 %v973
    %1227 = vmatprep.subr.bf16.mxu0 0
    %1228 = vmatpush1.bf16.msra.mxu0 %v972
    %1229 = vmatprep.subr.bf16.mxu0 0
    %1230 = vmatpush1.bf16.msra.mxu0 %v971
    %1231 = vmatprep.subr.bf16.mxu0 0
    %1232 = vmatpush1.bf16.msra.mxu0 %v970
    %1233 = vmatprep.subr.bf16.mxu0 0
    %1234 = vmatpush1.bf16.msra.mxu0 %v969
    %1235 = vmatprep.subr.bf16.mxu0 0
    %1236 = vmatpush2.bf16.msra.mxu0 0
    %1237 = vmatprep.subr.bf16.mxu0 0
    %1238 = vmatpush2.bf16.msra.mxu0 0
    %1239 = vmatprep.subr.bf16.mxu0 0
    %1240 = vmatpush2.bf16.msra.mxu0 0
    %1241 = vmatprep.subr.bf16.mxu0 0
    %1242 = vmatpush2.bf16.msra.mxu0 0
    %1243 = vmatprep.subr.bf16.mxu0 0
    %1244 = vmatpush2.bf16.msra.mxu0 0
    %1245 = vmatprep.subr.bf16.mxu0 0
    %1246 = vmatpush2.bf16.msra.mxu0 0
    %1247 = vmatprep.subr.bf16.mxu0 0
    %1248 = vmatpush2.bf16.msra.mxu0 %v978
    %1249 = vmatprep.subr.bf16.mxu0 0
    %1250 = vmatpush2.bf16.msra.mxu0 %v977
    %1251 = vmatprep.mubr.bf16.mxu0 %v1190
    %1252 = vmatmul.mubr.bf16.gmra.mxu0 %v1159
    %v1253 = vpop.f32.mrf.mxu0
    %v1254 = vadd.f32 %v1002, %v1253
    %v1255 = vpop.f32.mrf.mxu0
    %v1256 = vpop.f32.mrf.mxu0
    %v1257 = vadd.f32 %v1007, %v1256
    %v1258 = vpop.f32.mrf.mxu0
    %1259 = vmatprep.mubr.bf16.mxu0 %v1193
    %1260 = vmatmul.mubr.bf16.gmra.mxu0 %v1161
    %v1261 = vpop.f32.mrf.mxu0
    %v1262 = vadd.f32 %v1012, %v1261
    %v1263 = vpop.f32.mrf.mxu0
    %v1264 = vpop.f32.mrf.mxu0
    %v1265 = vadd.f32 %v1017, %v1264
    %v1266 = vpop.f32.mrf.mxu0
    %1267 = vmatprep.mubr.bf16.mxu0 %v1196
    %1268 = vmatmul.mubr.bf16.gmra.mxu0 %v1163
    %v1269 = vpop.f32.mrf.mxu0
    %v1270 = vadd.f32 %v1022, %v1269
    %v1271 = vpop.f32.mrf.mxu0
    %v1272 = vpop.f32.mrf.mxu0
    %v1273 = vadd.f32 %v1027, %v1272
    %v1274 = vpop.f32.mrf.mxu0
    %1275 = vmatprep.mubr.bf16.mxu0 %v1199
    %1276 = vmatmul.mubr.bf16.gmra.mxu0 %v1165
    %v1277 = vpop.f32.mrf.mxu0
    %v1278 = vadd.f32 %v1032, %v1277
    %v1279 = vpop.f32.mrf.mxu0
    %v1280 = vpop.f32.mrf.mxu0
    %v1281 = vadd.f32 %v1037, %v1280
    %v1282 = vpop.f32.mrf.mxu0
    %1283 = vmatprep.mubr.bf16.mxu0 %v1202
    %1284 = vmatmul.mubr.bf16.gmra.mxu0 %v1167
    %v1285 = vpop.f32.mrf.mxu0
    %v1286 = vadd.f32 %v1042, %v1285
    %v1287 = vpop.f32.mrf.mxu0
    %v1288 = vpop.f32.mrf.mxu0
    %v1289 = vadd.f32 %v1047, %v1288
    %v1290 = vpop.f32.mrf.mxu0
    %1291 = vmatprep.mubr.bf16.mxu0 %v1205
    %1292 = vmatmul.mubr.bf16.gmra.mxu0 %v1169
    %v1293 = vpop.f32.mrf.mxu0
    %v1294 = vadd.f32 %v1052, %v1293
    %v1295 = vpop.f32.mrf.mxu0
    %v1296 = vpop.f32.mrf.mxu0
    %v1297 = vadd.f32 %v1057, %v1296
    %v1298 = vpop.f32.mrf.mxu0
    %1299 = vmatprep.mubr.bf16.mxu0 %v1208
    %1300 = vmatmul.mubr.bf16.gmra.mxu0 %v1171
    %v1301 = vpop.f32.mrf.mxu0
    %v1302 = vadd.f32 %v1062, %v1301
    %v1303 = vpop.f32.mrf.mxu0
    %v1304 = vpop.f32.mrf.mxu0
    %v1305 = vadd.f32 %v1067, %v1304
    %v1306 = vpop.f32.mrf.mxu0
    %1307 = vmatprep.mubr.bf16.mxu0 %v1211
    %1308 = vmatmul.mubr.bf16.gmra.mxu0 %v1173
    %v1309 = vpop.f32.mrf.mxu0
    %v1310 = vadd.f32 %v1072, %v1309
    %v1311 = vpop.f32.mrf.mxu0
    %v1312 = vpop.f32.mrf.mxu0
    %v1313 = vadd.f32 %v1077, %v1312
    %v1314 = vpop.f32.mrf.mxu0
    %1315 = vmatprep.mubr.bf16.mxu0 %v1214
    %1316 = vmatmul.mubr.bf16.gmra.mxu0 %v1175
    %v1317 = vpop.f32.mrf.mxu0
    %v1318 = vadd.f32 %v1082, %v1317
    %v1319 = vpop.f32.mrf.mxu0
    %v1320 = vpop.f32.mrf.mxu0
    %v1321 = vadd.f32 %v1087, %v1320
    %v1322 = vpop.f32.mrf.mxu0
    %1323 = vmatprep.mubr.bf16.mxu0 %v1217
    %1324 = vmatmul.mubr.bf16.gmra.mxu0 %v1177
    %v1325 = vpop.f32.mrf.mxu0
    %v1326 = vadd.f32 %v1092, %v1325
    %v1327 = vpop.f32.mrf.mxu0
    %v1328 = vpop.f32.mrf.mxu0
    %v1329 = vadd.f32 %v1097, %v1328
    %v1330 = vpop.f32.mrf.mxu0
    %1331 = vdwg.mxu0
    %v1332 = vmul.f32 %v1254, 0.5
    %v1333 = vmul.f32 %v1257, 0.5
    %v1334 = vmul.f32 %v1262, 0.5
    %v1335 = vmul.f32 %v1265, 0.5
    %v1336 = vmul.f32 %v1270, 0.5
    %v1337 = vmul.f32 %v1273, 0.5
    %v1338 = vmul.f32 %v1278, 0.5
    %v1339 = vmul.f32 %v1281, 0.5
    %v1340 = vmul.f32 %v1286, 0.5
    %v1341 = vmul.f32 %v1289, 0.5
    %v1342 = vmul.f32 %v1294, 0.5
    %v1343 = vmul.f32 %v1297, 0.5
    %v1344 = vmul.f32 %v1302, 0.5
    %v1345 = vmul.f32 %v1305, 0.5
    %v1346 = vmul.f32 %v1310, 0.5
    %v1347 = vmul.f32 %v1313, 0.5
    %v1348 = vmul.f32 %v1318, 0.5
    %v1349 = vmul.f32 %v1321, 0.5
    %v1350 = vmul.f32 %v1326, 0.5
    %v1351 = vmul.f32 %v1329, 0.5
    %v1352 = vtanh.pop %v1332
    %v1353 = vtanh.pop %v1333
    %v1354 = vtanh.pop %v1334
    %v1355 = vtanh.pop %v1335
    %v1356 = vtanh.pop %v1336
    %v1357 = vtanh.pop %v1337
    %v1358 = vtanh.pop %v1338
    %v1359 = vtanh.pop %v1339
    %v1360 = vtanh.pop %v1340
    %v1361 = vtanh.pop %v1341
    %v1362 = vtanh.pop %v1342
    %v1363 = vtanh.pop %v1343
    %v1364 = vtanh.pop %v1344
    %v1365 = vtanh.pop %v1345
    %v1366 = vtanh.pop %v1346
    %v1367 = vtanh.pop %v1347
    %v1368 = vtanh.pop %v1348
    %v1369 = vtanh.pop %v1349
    %v1370 = vtanh.pop %v1350
    %v1371 = vtanh.pop %v1351
    %v1372 = vmul.f32 %v1352, 0.5
    %v1373 = vmul.f32 %v1353, 0.5
    %v1374 = vmul.f32 %v1354, 0.5
    %v1375 = vmul.f32 %v1355, 0.5
    %v1376 = vmul.f32 %v1356, 0.5
    %v1377 = vmul.f32 %v1357, 0.5
    %v1378 = vmul.f32 %v1358, 0.5
    %v1379 = vmul.f32 %v1359, 0.5
    %v1380 = vmul.f32 %v1360, 0.5
    %v1381 = vmul.f32 %v1361, 0.5
    %v1382 = vmul.f32 %v1362, 0.5
    %v1383 = vmul.f32 %v1363, 0.5
    %v1384 = vmul.f32 %v1364, 0.5
    %v1385 = vmul.f32 %v1365, 0.5
    %v1386 = vmul.f32 %v1366, 0.5
    %v1387 = vmul.f32 %v1367, 0.5
    %v1388 = vmul.f32 %v1368, 0.5
    %v1389 = vmul.f32 %v1369, 0.5
    %v1390 = vmul.f32 %v1370, 0.5
    %v1391 = vmul.f32 %v1371, 0.5
    %v1392 = vadd.f32 %v1372, 0.5
    %v1393 = vadd.f32 %v1373, 0.5
    %v1394 = vadd.f32 %v1374, 0.5
    %v1395 = vadd.f32 %v1375, 0.5
    %v1396 = vadd.f32 %v1376, 0.5
    %v1397 = vadd.f32 %v1377, 0.5
    %v1398 = vadd.f32 %v1378, 0.5
    %v1399 = vadd.f32 %v1379, 0.5
    %v1400 = vadd.f32 %v1380, 0.5
    %v1401 = vadd.f32 %v1381, 0.5
    %v1402 = vadd.f32 %v1382, 0.5
    %v1403 = vadd.f32 %v1383, 0.5
    %v1404 = vadd.f32 %v1384, 0.5
    %v1405 = vadd.f32 %v1385, 0.5
    %v1406 = vadd.f32 %v1386, 0.5
    %v1407 = vadd.f32 %v1387, 0.5
    %v1408 = vadd.f32 %v1388, 0.5
    %v1409 = vadd.f32 %v1389, 0.5
    %v1410 = vadd.f32 %v1390, 0.5
    %v1411 = vadd.f32 %v1391, 0.5
    %v1412 = vld [vmem:[%s7] sm:$0xff]
    %v1413 = vld [vmem:[%s7 + $0x8] sm:$0xff]
    %v1414 = vld [vmem:[%s7 + $0x10] sm:$0xff]
    %v1415 = vld [vmem:[%s7 + $0x18] sm:$0xff]
    %v1416 = vld [vmem:[%s7 + $0x20] sm:$0xff]
    %v1417 = vld [vmem:[%s7 + $0x28] sm:$0xff]
    %v1418 = vld [vmem:[%s7 + $0x30] sm:$0xff]
    %v1419 = vld [vmem:[%s7 + $0x38] sm:$0xff]
    %v1420 = vld [vmem:[%s7 + $0x40] sm:$0xff]
    %v1421 = vld [vmem:[%s7 + $0x48] sm:$0xff]
    %v1422 = vld [vmem:[%s7 + $0x50] sm:$0xff]
    %v1423 = vld [vmem:[%s7 + $0x58] sm:$0xff]
    %v1424 = vld [vmem:[%s7 + $0x60] sm:$0xff]
    %v1425 = vld [vmem:[%s7 + $0x68] sm:$0xff]
    %v1426 = vld [vmem:[%s7 + $0x70] sm:$0xff]
    %v1427 = vld [vmem:[%s7 + $0x78] sm:$0xff]
    %v1428 = vld [vmem:[%s7 + $0x80] sm:$0xff]
    %v1429 = vld [vmem:[%s7 + $0x88] sm:$0xff]
    %v1430 = vld [vmem:[%s7 + $0x90] sm:$0xff]
    %v1431 = vld [vmem:[%s7 + $0x98] sm:$0xff]
    %1433 = vset.pattern.permute.xlu0 0
    %1434 = vperm.xlu0 %1433, %v1412
    %v1435 = vpop.permute.xlu0 %1434
    %1438 = vset.pattern.permute.xlu0 0
    %1439 = vperm.xlu0 %1438, %v1413
    %v1440 = vpop.permute.xlu0 %1439
    %1443 = vset.pattern.permute.xlu0 0
    %1444 = vperm.xlu0 %1443, %v1414
    %v1445 = vpop.permute.xlu0 %1444
    %1448 = vset.pattern.permute.xlu0 0
    %1449 = vperm.xlu0 %1448, %v1415
    %v1450 = vpop.permute.xlu0 %1449
    %1453 = vset.pattern.permute.xlu0 0
    %1454 = vperm.xlu0 %1453, %v1416
    %v1455 = vpop.permute.xlu0 %1454
    %1458 = vset.pattern.permute.xlu0 0
    %1459 = vperm.xlu0 %1458, %v1417
    %v1460 = vpop.permute.xlu0 %1459
    %1463 = vset.pattern.permute.xlu0 0
    %1464 = vperm.xlu0 %1463, %v1418
    %v1465 = vpop.permute.xlu0 %1464
    %1468 = vset.pattern.permute.xlu0 0
    %1469 = vperm.xlu0 %1468, %v1419
    %v1470 = vpop.permute.xlu0 %1469
    %1473 = vset.pattern.permute.xlu0 0
    %1474 = vperm.xlu0 %1473, %v1420
    %v1475 = vpop.permute.xlu0 %1474
    %1478 = vset.pattern.permute.xlu0 0
    %1479 = vperm.xlu0 %1478, %v1421
    %v1480 = vpop.permute.xlu0 %1479
    %1483 = vset.pattern.permute.xlu0 0
    %1484 = vperm.xlu0 %1483, %v1422
    %v1485 = vpop.permute.xlu0 %1484
    %1488 = vset.pattern.permute.xlu0 0
    %1489 = vperm.xlu0 %1488, %v1423
    %v1490 = vpop.permute.xlu0 %1489
    %1493 = vset.pattern.permute.xlu0 0
    %1494 = vperm.xlu0 %1493, %v1424
    %v1495 = vpop.permute.xlu0 %1494
    %1498 = vset.pattern.permute.xlu0 0
    %1499 = vperm.xlu0 %1498, %v1425
    %v1500 = vpop.permute.xlu0 %1499
    %1503 = vset.pattern.permute.xlu0 0
    %1504 = vperm.xlu0 %1503, %v1426
    %v1505 = vpop.permute.xlu0 %1504
    %1508 = vset.pattern.permute.xlu0 0
    %1509 = vperm.xlu0 %1508, %v1427
    %v1510 = vpop.permute.xlu0 %1509
    %1513 = vset.pattern.permute.xlu0 0
    %1514 = vperm.xlu0 %1513, %v1428
    %v1515 = vpop.permute.xlu0 %1514
    %1518 = vset.pattern.permute.xlu0 0
    %1519 = vperm.xlu0 %1518, %v1429
    %v1520 = vpop.permute.xlu0 %1519
    %1523 = vset.pattern.permute.xlu0 0
    %1524 = vperm.xlu0 %1523, %v1430
    %v1525 = vpop.permute.xlu0 %1524
    %1528 = vset.pattern.permute.xlu0 0
    %1529 = vperm.xlu0 %1528, %v1431
    %v1530 = vpop.permute.xlu0 %1529
    %v1532 = vmul.f32 %v1392, %v1435
    %v1533 = vmul.f32 %v1393, %v1440
    %v1534 = vmul.f32 %v1394, %v1445
    %v1535 = vmul.f32 %v1395, %v1450
    %v1536 = vmul.f32 %v1396, %v1455
    %v1537 = vmul.f32 %v1397, %v1460
    %v1538 = vmul.f32 %v1398, %v1465
    %v1539 = vmul.f32 %v1399, %v1470
    %v1540 = vmul.f32 %v1400, %v1475
    %v1541 = vmul.f32 %v1401, %v1480
    %v1542 = vmul.f32 %v1402, %v1485
    %v1543 = vmul.f32 %v1403, %v1490
    %v1544 = vmul.f32 %v1404, %v1495
    %v1545 = vmul.f32 %v1405, %v1500
    %v1546 = vmul.f32 %v1406, %v1505
    %v1547 = vmul.f32 %v1407, %v1510
    %v1548 = vmul.f32 %v1408, %v1515
    %v1549 = vmul.f32 %v1409, %v1520
    %v1550 = vmul.f32 %v1410, %v1525
    %v1551 = vmul.f32 %v1411, %v1530
    %v1552 = vadd.f32 %v1532, %v1533
    %v1553 = vadd.f32 %v1552, %v1534
    %v1554 = vadd.f32 %v1553, %v1535
    %v1555 = vadd.f32 %v1554, %v1536
    %v1556 = vadd.f32 %v1555, %v1537
    %v1557 = vadd.f32 %v1556, %v1538
    %v1558 = vadd.f32 %v1557, %v1539
    %v1559 = vadd.f32 %v1558, %v1540
    %v1560 = vadd.f32 %v1559, %v1541
    %v1561 = vadd.f32 %v1560, %v1542
    %v1562 = vadd.f32 %v1561, %v1543
    %v1563 = vadd.f32 %v1562, %v1544
    %v1564 = vadd.f32 %v1563, %v1545
    %v1565 = vadd.f32 %v1564, %v1546
    %v1566 = vadd.f32 %v1565, %v1547
    %v1567 = vadd.f32 %v1566, %v1548
    %v1568 = vadd.f32 %v1567, %v1549
    %v1569 = vadd.f32 %v1568, %v1550
    %v1570 = vadd.f32 %v1569, %v1551
    %v1571 = vrot.slane %v1570, 4
    %v1572 = vadd.f32 %v1570, %v1571
    %v1573 = vrot.slane %v1572, 2
    %v1574 = vadd.f32 %v1572, %v1573
    %v1575 = vrot.slane %v1574, 1
    %v1576 = vadd.f32 %v1574, %v1575
    %v1577 = vld [vmem:[#allocation2] sm:$0x1]
    %1579 = vset.pattern.permute.xlu0 0
    %1580 = vperm.xlu0 %1579, %v1577
    %v1581 = vpop.permute.xlu0 %1580
    %v1583 = vlaneseq
    %v1584 = vshrl.u32 %v1583, 7
    %v1585 = vsub.s32 0, %v1584
    %v1586 = vrot.slane %v1581, %v1585
    %v1587 = vadd.f32 %v1576, %v1586
    %v1588 = vmul.f32 %v1587, 0.5
    %v1589 = vtanh.pop %v1588
    %v1590 = vmul.f32 %v1589, 0.5
    %v1591 = vadd.f32 %v1590, 0.5
    %1592 = vst [vmem:[#allocation3] sm:$0x1] %v1591
    // Predicated region
    $region38: #{tpu_custom_call.1} parent=1 // pred_check
      _
    $region39: #{tpu_custom_call.1} parent=1 // pred_check_branch
      %1594 = sbr.rel (0) target = $region41
    $region40: #{tpu_custom_call.1} parent=1 // pred_region
      %s1596 = ssub.s32 16, 16
      %1597 = vsyncadd [#allocation4], %s1596
      %s1599 = sshll.u32 [#allocation3], 4
      %s1600 = int_to_ptr.vmem [resolvable:$true] %s1599
      %1602 = dma.vmem_to_hbm [thread:$0]  %s1600, 16, %s9, [#allocation4]
    $region41: #{tpu_custom_call.1} parent=1 // pred_fallthru
      _
    // Predicated region
    $region42: #{tpu_custom_call.1} parent=1 // pred_check
      _
    $region43: #{tpu_custom_call.1} parent=1 // pred_check_branch
      %1604 = sbr.rel (0) target = $region45
    $region44: #{tpu_custom_call.1} parent=1 // pred_region
      %1605 = dma.done [#allocation4], 16
    $region45: #{tpu_custom_call.1} parent=1 // pred_fallthru
      _
    %1606 = vsyncpa [#allocation4], 1

</llo_original>
